<compile_context>
chip_gen: v7x
topology: tpu7x:2x2x1
jax: 0.10.0
libtpu: 0.0.40
codegen_flags: <defaults>
</compile_context>

<pallas_src>
import functools

import jax
import jax.numpy as jnp
import numpy as np
from jax.experimental import pallas as pl
from jax.experimental.pallas import tpu as pltpu


def _round_up(x, m):
    return ((x + m - 1) // m) * m


# ---------------------------------------------------------------------------
# Host-side compile-time constants for the lane-dense tail (built ONCE).
# Head lanes:   [0:A]=mu, [A]=V, [A+1]=V(dup), [A+2:A+2+A*A]=L flat, rest 0.
# Output lanes: [0:A]=delta, [A]=Q, [A+1]=V, rest 0.
# ---------------------------------------------------------------------------
def _tail_constants(action_space):
    A = action_space
    L0 = A + 2                                   # first L lane
    k = np.arange(A * A)                         # flat L index: k = i*A + j
    masks = np.zeros((8, 128), np.float32)
    masks[0, L0 + k] = ((k % A) < (k // A)).astype(np.float32)   # strict lower tri
    masks[1, L0 + k] = 1.0                                        # all L lanes
    masks[2, [A, A + 1]] = 1.0                                    # V -> Q and V lanes
    masks[3, A] = 1.0                                             # adv -> Q lane
    masks[4, :A] = 1.0                                            # delta lanes

    rep = np.zeros((A, 128), np.float32)
    rep[np.arange(A), np.arange(A)] = 1.0        # delta passthrough -> out lanes [0:A]
    rep[k // A, L0 + k] = 1.0                    # delta_i replicated across L row i

    sel = np.zeros((128, 128), np.float32)
    sel[L0 + k, k % A] = 1.0                     # y_j = sum_i L[i,j] * delta_i
    return masks, rep, sel


# ---------------------------------------------------------------------------
# Kernel
# ---------------------------------------------------------------------------
def agent_kernel(sa_ref, w1_ref, b1_ref, w2_ref, b2_ref, wh_ref, bh_ref,
                 masks_ref, rep_ref, sel_ref, out_ref, *, action_space):
    f32, bf16 = jnp.float32, jnp.bfloat16
    A = action_space

    sa = sa_ref[...]                                        # (TB, A+S) f32, [action|state]

    # x = relu(l1([action|state])): action rows of w1 are zero.
    x = jnp.dot(sa.astype(bf16), w1_ref[...], preferred_element_type=f32) + b1_ref[...]
    x = jnp.maximum(x, 0.0)
    # x = relu(l2(x))
    x = jnp.dot(x.astype(bf16), w2_ref[...], preferred_element_type=f32) + b2_ref[...]
    x = jnp.maximum(x, 0.0)

    # Fused head (l4 | l3 | l3 | l5) -> one 128-lane matmul.
    h = jnp.dot(x.astype(bf16), wh_ref[...], preferred_element_type=f32) + bh_ref[...]

    m = masks_ref[...]                                      # (8, 128) f32 constants
    tril, lmask, vvmask, advmask, mumask = m[0:1], m[1:2], m[2:3], m[3:4], m[4:5]

    # delta = action - relu(mu): both operands live at lane offset 0 (no relayout).
    delta = sa[:, :A] - jnp.maximum(h[:, :A], 0.0)          # (TB, A) f32

    # L = L * strict_tril + exp(L) on the L lanes (all-ones diagonal_mask bug
    # reproduced); masking h before exp keeps non-L lanes finite (exp(0)=1 -> *0).
    Lm = h * tril + jnp.exp(h * lmask) * lmask              # (TB, 128)

    # Quadratic form, lane-dense:
    #   drep has delta at lanes [0:A] (output passthrough) and delta_i
    #   replicated across L row i; y_j = sum_i L[i,j] delta_i at lanes [0:A].
    drep = jnp.dot(delta, rep_ref[...], preferred_element_type=f32)      # (TB, 128)
    y = jnp.dot(Lm * drep, sel_ref[...], preferred_element_type=f32)     # (TB, 128)
    adv = -0.5 * jnp.sum(y * y, axis=-1, keepdims=True)                  # (TB, 1)

    # [delta | Q=adv+V | V | 0...] assembled with three masked adds.
    out = drep * mumask + h * vvmask + adv * advmask
    out_ref[...] = out.astype(out_ref.dtype)                # bf16 lane-dense store


# ---------------------------------------------------------------------------
# Wrapper
# ---------------------------------------------------------------------------
def agent_forward(state, action, kp, *, action_space, block_b=2048):
    B, S = state.shape
    A = action_space
    OUT_W = 128

    # TODO(synk): callers in an RL loop should build/keep the fused [action|state]
    # array directly and keep weights VMEM-resident across calls (P10).
    sa = jnp.concatenate([action, state], axis=1)           # (B, A+S), action first

    # Batch tile: big (up to block_b) but always >=2 grid steps when B > 16 so
    # the 'parallel' grid axis feeds both v7x TensorCores.  Multiple of 16 keeps
    # the bf16 output block tile-aligned; B<=16 uses one full-dim block.
    if B <= 16:
        TB = B
    else:
        TB = min(block_b, max(16, _round_up(pl.cdiv(B, 2), 16)))
    grid = (pl.cdiv(B, TB),)

    row = lambda i: (i, 0)       # batch-tiled arrays
    const = lambda i: (0, 0)     # weights / constants: same block every step

    out = pl.pallas_call(
        functools.partial(agent_kernel, action_space=A),
        out_shape=jax.ShapeDtypeStruct((B, OUT_W), jnp.bfloat16),
        grid_spec=pltpu.PrefetchScalarGridSpec(
            num_scalar_prefetch=0,
            grid=grid,
            in_specs=[
                pl.BlockSpec((TB, A + S), row),             # fused [action|state] f32
                pl.BlockSpec(kp["w1"].shape, const),        # (A+S, 128) bf16
                pl.BlockSpec(kp["b1"].shape, const),        # (1, 128)   f32
                pl.BlockSpec(kp["w2"].shape, const),        # (128, 512) bf16
                pl.BlockSpec(kp["b2"].shape, const),        # (1, 512)   f32
                pl.BlockSpec(kp["wh"].shape, const),        # (512, 128) bf16
                pl.BlockSpec(kp["bh"].shape, const),        # (1, 128)   f32
                pl.BlockSpec(kp["masks"].shape, const),     # (8, 128)   f32 lane masks
                pl.BlockSpec(kp["rep"].shape, const),       # (A, 128)   f32 selector
                pl.BlockSpec(kp["sel"].shape, const),       # (128, 128) f32 selector
            ],
            out_specs=pl.BlockSpec((TB, OUT_W), row),
        ),
        compiler_params=pltpu.CompilerParams(
            dimension_semantics=("parallel",),              # shard grid over v7x TCs
            vmem_limit_bytes=32 * 1024 * 1024,
        ),
    )(sa, kp["w1"], kp["b1"], kp["w2"], kp["b2"], kp["wh"], kp["bh"],
      kp["masks"], kp["rep"], kp["sel"])

    mu = out[:, :A].astype(jnp.float32)
    Q = out[:, A:A + 1].astype(jnp.float32)
    V = out[:, A + 1:A + 2].astype(jnp.float32)
    return mu, Q, V


# ---------------------------------------------------------------------------
# Parameters
# ---------------------------------------------------------------------------
def init_params(key, state_space, action_space):
    """Deterministic PyTorch-Linear-style init (U(-1/sqrt(fan_in), +)), f32."""
    ks = jax.random.split(key, 10)

    def linear(kw, kb, fan_in, fan_out):
        bound = 1.0 / (fan_in ** 0.5)
        w = jax.random.uniform(kw, (fan_in, fan_out), jnp.float32, -bound, bound)
        b = jax.random.uniform(kb, (1, fan_out), jnp.float32, -bound, bound)
        return w, b

    A = action_space
    w1, b1 = linear(ks[0], ks[1], state_space, 100)
    w2, b2 = linear(ks[2], ks[3], 100, 500)
    w3, b3 = linear(ks[4], ks[5], 500, 1)
    w4, b4 = linear(ks[6], ks[7], 500, A)
    w5, b5 = linear(ks[8], ks[9], 500, A * A)
    return dict(w1=w1, b1=b1, w2=w2, b2=b2, w3=w3, b3=b3,
                w4=w4, b4=b4, w5=w5, b5=b5)


def pack_params(raw, state_space, action_space):
    """Pad hidden dims to (128, 512), prepend A zero rows to w1 (action lanes of
    the fused input), fuse l4|l3|l3|l5 into one 128-lane head, bake the tail
    masks/selectors, and store weight matrices as bf16 (biases stay f32)."""
    A, S = action_space, state_space
    H1, H2, LANES = 128, 512, 128
    assert A * A + A + 2 <= LANES, "head layout needs A*A + A + 2 <= 128"
    f32, bf16 = jnp.float32, jnp.bfloat16
    h1r = raw["w1"].shape[1]    # 100
    h2r = raw["w2"].shape[1]    # 500

    def place(shape, w, r0=0, c0=0):
        out = jnp.zeros(shape, f32)
        return out.at[r0:r0 + w.shape[0], c0:c0 + w.shape[1]].set(w)

    w1 = place((A + S, H1), raw["w1"], r0=A)     # action rows are zero
    b1 = place((1, H1), raw["b1"])
    w2 = place((H1, H2), raw["w2"])
    b2 = place((1, H2), raw["b2"])

    wh = jnp.zeros((H2, LANES), f32)
    wh = wh.at[:h2r, 0:A].set(raw["w4"])                       # mu
    wh = wh.at[:h2r, A:A + 1].set(raw["w3"])                   # V (Q lane source)
    wh = wh.at[:h2r, A + 1:A + 2].set(raw["w3"])               # V (V lane)
    wh = wh.at[:h2r, A + 2:A + 2 + A * A].set(raw["w5"])       # L flat
    bh = jnp.zeros((1, LANES), f32)
    bh = bh.at[:, 0:A].set(raw["b4"])
    bh = bh.at[:, A:A + 1].set(raw["b3"])
    bh = bh.at[:, A + 1:A + 2].set(raw["b3"])
    bh = bh.at[:, A + 2:A + 2 + A * A].set(raw["b5"])

    masks, rep, sel = _tail_constants(A)

    return dict(w1=w1.astype(bf16), b1=b1,
                w2=w2.astype(bf16), b2=b2,
                wh=wh.astype(bf16), bh=bh,
                masks=jnp.asarray(masks), rep=jnp.asarray(rep), sel=jnp.asarray(sel))


# ---------------------------------------------------------------------------
# Pure-JAX f32 reference (PyTorch semantics; see TODO notes at top)
# ---------------------------------------------------------------------------
def ref_forward(state, action, p):
    relu = jax.nn.relu
    x = relu(state @ p["w1"] + p["b1"])
    x = relu(x @ p["w2"] + p["b2"])
    V = x @ p["w3"] + p["b3"]
    mu = relu(x @ p["w4"] + p["b4"])
    B = state.shape[0]
    A = p["w4"].shape[1]
    L = (x @ p["w5"] + p["b5"]).reshape(B, A, A)
    tril = jnp.tril(jnp.ones((A, A), jnp.float32), -1)[None]
    L = L * tril + jnp.exp(L)            # expanded diagonal_mask == all ones
    P = jnp.einsum("bij,bkj->bik", L, L)
    delta = action - mu
    a = jnp.einsum("bi,bij->bj", delta, P)
    adv = -0.5 * jnp.einsum("bj,bj->b", a, delta)[:, None]
    return delta, adv + V, V


if __name__ == "__main__":
    B, S, A = 32, 16, 4  # batch (2 grid steps), state_space, action_space

    key = jax.random.PRNGKey(0)
    k_param, k_state, k_action = jax.random.split(key, 3)
    raw = init_params(k_param, S, A)
    kp = pack_params(raw, S, A)
    state = jax.random.normal(k_state, (B, S), jnp.float32)
    action = jax.random.normal(k_action, (B, A), jnp.float32)

    mu, Q, V = jax.block_until_ready(agent_forward(state, action, kp, action_space=A))

    mu_r, Q_r, V_r = ref_forward(state, action, raw)
    # Tolerances cover bf16 weight storage + bf16 output slab (compute stays f32).
    np.testing.assert_allclose(np.asarray(mu), np.asarray(mu_r), rtol=4e-2, atol=2e-2)
    np.testing.assert_allclose(np.asarray(Q), np.asarray(Q_r), rtol=4e-2, atol=2e-2)
    np.testing.assert_allclose(np.asarray(V), np.asarray(V_r), rtol=4e-2, atol=2e-2)

    print("KERNEL_OK")
</pallas_src>

<mosaic_0001>
module attributes {stable_mosaic.version = 11 : i64} {
  func.func @agent_kernel(%arg0: i32, %arg1: memref<16x20xf32, #tpu.memory_space<vmem>>, %arg2: memref<20x128xbf16, #tpu.memory_space<vmem>>, %arg3: memref<1x128xf32, #tpu.memory_space<vmem>>, %arg4: memref<128x512xbf16, #tpu.memory_space<vmem>>, %arg5: memref<1x512xf32, #tpu.memory_space<vmem>>, %arg6: memref<512x128xbf16, #tpu.memory_space<vmem>>, %arg7: memref<1x128xf32, #tpu.memory_space<vmem>>, %arg8: memref<8x128xf32, #tpu.memory_space<vmem>>, %arg9: memref<4x128xf32, #tpu.memory_space<vmem>>, %arg10: memref<128x128xf32, #tpu.memory_space<vmem>>, %arg11: memref<16x128xbf16, #tpu.memory_space<vmem>>) attributes {dimension_semantics = [#tpu.dimension_semantics<parallel>], iteration_bounds = array<i64: 2>, scalar_prefetch = 0 : i64, scratch_operands = 0 : i64, tpu.core_type = #tpu.core_type<tc>, window_params = [{transform_indices = @transform_0, window_bounds = array<i64: 16, 20>}, {pipeline_mode = #tpu.pipeline_mode<synchronous>, transform_indices = @transform_1, window_bounds = array<i64: 20, 128>}, {pipeline_mode = #tpu.pipeline_mode<synchronous>, transform_indices = @transform_2, window_bounds = array<i64: 1, 128>}, {pipeline_mode = #tpu.pipeline_mode<synchronous>, transform_indices = @transform_3, window_bounds = array<i64: 128, 512>}, {pipeline_mode = #tpu.pipeline_mode<synchronous>, transform_indices = @transform_4, window_bounds = array<i64: 1, 512>}, {pipeline_mode = #tpu.pipeline_mode<synchronous>, transform_indices = @transform_5, window_bounds = array<i64: 512, 128>}, {pipeline_mode = #tpu.pipeline_mode<synchronous>, transform_indices = @transform_6, window_bounds = array<i64: 1, 128>}, {pipeline_mode = #tpu.pipeline_mode<synchronous>, transform_indices = @transform_7, window_bounds = array<i64: 8, 128>}, {pipeline_mode = #tpu.pipeline_mode<synchronous>, transform_indices = @transform_8, window_bounds = array<i64: 4, 128>}, {pipeline_mode = #tpu.pipeline_mode<synchronous>, transform_indices = @transform_9, window_bounds = array<i64: 128, 128>}, {transform_indices = @transform_10, window_bounds = array<i64: 16, 128>}]} {
    %c0 = arith.constant 0 : index
    %c0_0 = arith.constant 0 : index
    %0 = vector.load %arg1[%c0, %c0_0] : memref<16x20xf32, #tpu.memory_space<vmem>>, vector<16x20xf32>
    %1 = arith.truncf %0 : vector<16x20xf32> to vector<16x20xbf16>
    %c0_1 = arith.constant 0 : index
    %c0_2 = arith.constant 0 : index
    %2 = vector.load %arg2[%c0_1, %c0_2] : memref<20x128xbf16, #tpu.memory_space<vmem>>, vector<20x128xbf16>
    %cst = arith.constant dense<0.000000e+00> : vector<16x128xf32>
    %3 = tpu.matmul %1, %2, %cst {dimension_numbers = #tpu.dot_dimension_numbers<[1], [0], [0], [1], [0, 0, 1, 1], [], []>} : vector<16x20xbf16>, vector<20x128xbf16>, vector<16x128xf32> -> vector<16x128xf32>
    %c0_3 = arith.constant 0 : index
    %c0_4 = arith.constant 0 : index
    %4 = vector.load %arg3[%c0_3, %c0_4] : memref<1x128xf32, #tpu.memory_space<vmem>>, vector<1x128xf32>
    %5 = vector.broadcast %4 : vector<1x128xf32> to vector<16x128xf32>
    %6 = arith.addf %3, %5 : vector<16x128xf32>
    %cst_5 = arith.constant 0.000000e+00 : f32
    %7 = vector.broadcast %cst_5 : f32 to vector<16x128xf32>
    %8 = arith.maximumf %6, %7 : vector<16x128xf32>
    %9 = arith.truncf %8 : vector<16x128xf32> to vector<16x128xbf16>
    %c0_6 = arith.constant 0 : index
    %c0_7 = arith.constant 0 : index
    %10 = vector.load %arg4[%c0_6, %c0_7] : memref<128x512xbf16, #tpu.memory_space<vmem>>, vector<128x512xbf16>
    %cst_8 = arith.constant dense<0.000000e+00> : vector<16x512xf32>
    %11 = tpu.matmul %9, %10, %cst_8 {dimension_numbers = #tpu.dot_dimension_numbers<[1], [0], [0], [1], [0, 0, 1, 1], [], []>} : vector<16x128xbf16>, vector<128x512xbf16>, vector<16x512xf32> -> vector<16x512xf32>
    %c0_9 = arith.constant 0 : index
    %c0_10 = arith.constant 0 : index
    %12 = vector.load %arg5[%c0_9, %c0_10] : memref<1x512xf32, #tpu.memory_space<vmem>>, vector<1x512xf32>
    %13 = vector.broadcast %12 : vector<1x512xf32> to vector<16x512xf32>
    %14 = arith.addf %11, %13 : vector<16x512xf32>
    %cst_11 = arith.constant 0.000000e+00 : f32
    %15 = vector.broadcast %cst_11 : f32 to vector<16x512xf32>
    %16 = arith.maximumf %14, %15 : vector<16x512xf32>
    %17 = arith.truncf %16 : vector<16x512xf32> to vector<16x512xbf16>
    %c0_12 = arith.constant 0 : index
    %c0_13 = arith.constant 0 : index
    %18 = vector.load %arg6[%c0_12, %c0_13] : memref<512x128xbf16, #tpu.memory_space<vmem>>, vector<512x128xbf16>
    %cst_14 = arith.constant dense<0.000000e+00> : vector<16x128xf32>
    %19 = tpu.matmul %17, %18, %cst_14 {dimension_numbers = #tpu.dot_dimension_numbers<[1], [0], [0], [1], [0, 0, 1, 1], [], []>} : vector<16x512xbf16>, vector<512x128xbf16>, vector<16x128xf32> -> vector<16x128xf32>
    %c0_15 = arith.constant 0 : index
    %c0_16 = arith.constant 0 : index
    %20 = vector.load %arg7[%c0_15, %c0_16] : memref<1x128xf32, #tpu.memory_space<vmem>>, vector<1x128xf32>
    %21 = vector.broadcast %20 : vector<1x128xf32> to vector<16x128xf32>
    %22 = arith.addf %19, %21 : vector<16x128xf32>
    %c0_17 = arith.constant 0 : index
    %c0_18 = arith.constant 0 : index
    %23 = vector.load %arg8[%c0_17, %c0_18] : memref<8x128xf32, #tpu.memory_space<vmem>>, vector<8x128xf32>
    %24 = vector.extract_strided_slice %23 {offsets = [0, 0], sizes = [1, 128], strides = [1, 1]} : vector<8x128xf32> to vector<1x128xf32>
    %25 = vector.extract_strided_slice %23 {offsets = [1, 0], sizes = [1, 128], strides = [1, 1]} : vector<8x128xf32> to vector<1x128xf32>
    %26 = vector.extract_strided_slice %23 {offsets = [2, 0], sizes = [1, 128], strides = [1, 1]} : vector<8x128xf32> to vector<1x128xf32>
    %27 = vector.extract_strided_slice %23 {offsets = [3, 0], sizes = [1, 128], strides = [1, 1]} : vector<8x128xf32> to vector<1x128xf32>
    %28 = vector.extract_strided_slice %23 {offsets = [4, 0], sizes = [1, 128], strides = [1, 1]} : vector<8x128xf32> to vector<1x128xf32>
    %29 = vector.extract_strided_slice %0 {offsets = [0, 0], sizes = [16, 4], strides = [1, 1]} : vector<16x20xf32> to vector<16x4xf32>
    %30 = vector.extract_strided_slice %22 {offsets = [0, 0], sizes = [16, 4], strides = [1, 1]} : vector<16x128xf32> to vector<16x4xf32>
    %cst_19 = arith.constant 0.000000e+00 : f32
    %31 = vector.broadcast %cst_19 : f32 to vector<16x4xf32>
    %32 = arith.maximumf %30, %31 : vector<16x4xf32>
    %33 = arith.subf %29, %32 : vector<16x4xf32>
    %34 = vector.broadcast %24 : vector<1x128xf32> to vector<16x128xf32>
    %35 = arith.mulf %22, %34 : vector<16x128xf32>
    %36 = vector.broadcast %25 : vector<1x128xf32> to vector<16x128xf32>
    %37 = arith.mulf %22, %36 : vector<16x128xf32>
    %38 = math.exp %37 : vector<16x128xf32>
    %39 = vector.broadcast %25 : vector<1x128xf32> to vector<16x128xf32>
    %40 = arith.mulf %38, %39 : vector<16x128xf32>
    %41 = arith.addf %35, %40 : vector<16x128xf32>
    %c0_20 = arith.constant 0 : index
    %c0_21 = arith.constant 0 : index
    %42 = vector.load %arg9[%c0_20, %c0_21] : memref<4x128xf32, #tpu.memory_space<vmem>>, vector<4x128xf32>
    %cst_22 = arith.constant dense<0.000000e+00> : vector<16x128xf32>
    %43 = tpu.matmul %33, %42, %cst_22 {dimension_numbers = #tpu.dot_dimension_numbers<[1], [0], [0], [1], [0, 0, 1, 1], [], []>} : vector<16x4xf32>, vector<4x128xf32>, vector<16x128xf32> -> vector<16x128xf32>
    %44 = arith.mulf %41, %43 : vector<16x128xf32>
    %c0_23 = arith.constant 0 : index
    %c0_24 = arith.constant 0 : index
    %45 = vector.load %arg10[%c0_23, %c0_24] : memref<128x128xf32, #tpu.memory_space<vmem>>, vector<128x128xf32>
    %cst_25 = arith.constant dense<0.000000e+00> : vector<16x128xf32>
    %46 = tpu.matmul %44, %45, %cst_25 {dimension_numbers = #tpu.dot_dimension_numbers<[1], [0], [0], [1], [0, 0, 1, 1], [], []>} : vector<16x128xf32>, vector<128x128xf32>, vector<16x128xf32> -> vector<16x128xf32>
    %47 = arith.mulf %46, %46 : vector<16x128xf32>
    %cst_26 = arith.constant dense<0.000000e+00> : vector<16xf32>
    %48 = vector.multi_reduction <add>, %47, %cst_26 [1] : vector<16x128xf32> to vector<16xf32>
    %49 = vector.shape_cast %48 : vector<16xf32> to vector<16x1xf32>
    %cst_27 = arith.constant -5.000000e-01 : f32
    %50 = vector.broadcast %cst_27 : f32 to vector<16x1xf32>
    %51 = arith.mulf %50, %49 : vector<16x1xf32>
    %52 = vector.broadcast %28 : vector<1x128xf32> to vector<16x128xf32>
    %53 = arith.mulf %43, %52 : vector<16x128xf32>
    %54 = vector.broadcast %26 : vector<1x128xf32> to vector<16x128xf32>
    %55 = arith.mulf %22, %54 : vector<16x128xf32>
    %56 = arith.addf %53, %55 : vector<16x128xf32>
    %57 = vector.broadcast %51 : vector<16x1xf32> to vector<16x128xf32>
    %58 = vector.broadcast %27 : vector<1x128xf32> to vector<16x128xf32>
    %59 = arith.mulf %57, %58 : vector<16x128xf32>
    %60 = arith.addf %56, %59 : vector<16x128xf32>
    %61 = arith.truncf %60 : vector<16x128xf32> to vector<16x128xbf16>
    %c0_28 = arith.constant 0 : index
    %c0_29 = arith.constant 0 : index
    %62 = vector.load %arg11[%c0_28, %c0_29] : memref<16x128xbf16, #tpu.memory_space<vmem>>, vector<16x128xbf16>
    tpu.vector_store %arg11[%c0_28, %c0_29], %61 {strides = array<i32>} : memref<16x128xbf16, #tpu.memory_space<vmem>>, vector<16x128xbf16>,
    return
  }
  func.func @transform_0(%arg0: i32) -> (i32, i32) {
    %c0_i32 = arith.constant 0 : i32
    %c0_i32_0 = arith.constant 0 : i32
    return %arg0, %c0_i32 : i32, i32
  }
  func.func @transform_1(%arg0: i32) -> (i32, i32) {
    %c0_i32 = arith.constant 0 : i32
    %c0_i32_0 = arith.constant 0 : i32
    %c0_i32_1 = arith.constant 0 : i32
    return %c0_i32, %c0_i32_0 : i32, i32
  }
  func.func @transform_2(%arg0: i32) -> (i32, i32) {
    %c0_i32 = arith.constant 0 : i32
    %c0_i32_0 = arith.constant 0 : i32
    %c0_i32_1 = arith.constant 0 : i32
    return %c0_i32, %c0_i32_0 : i32, i32
  }
  func.func @transform_3(%arg0: i32) -> (i32, i32) {
    %c0_i32 = arith.constant 0 : i32
    %c0_i32_0 = arith.constant 0 : i32
    %c0_i32_1 = arith.constant 0 : i32
    return %c0_i32, %c0_i32_0 : i32, i32
  }
  func.func @transform_4(%arg0: i32) -> (i32, i32) {
    %c0_i32 = arith.constant 0 : i32
    %c0_i32_0 = arith.constant 0 : i32
    %c0_i32_1 = arith.constant 0 : i32
    return %c0_i32, %c0_i32_0 : i32, i32
  }
  func.func @transform_5(%arg0: i32) -> (i32, i32) {
    %c0_i32 = arith.constant 0 : i32
    %c0_i32_0 = arith.constant 0 : i32
    %c0_i32_1 = arith.constant 0 : i32
    return %c0_i32, %c0_i32_0 : i32, i32
  }
  func.func @transform_6(%arg0: i32) -> (i32, i32) {
    %c0_i32 = arith.constant 0 : i32
    %c0_i32_0 = arith.constant 0 : i32
    %c0_i32_1 = arith.constant 0 : i32
    return %c0_i32, %c0_i32_0 : i32, i32
  }
  func.func @transform_7(%arg0: i32) -> (i32, i32) {
    %c0_i32 = arith.constant 0 : i32
    %c0_i32_0 = arith.constant 0 : i32
    %c0_i32_1 = arith.constant 0 : i32
    return %c0_i32, %c0_i32_0 : i32, i32
  }
  func.func @transform_8(%arg0: i32) -> (i32, i32) {
    %c0_i32 = arith.constant 0 : i32
    %c0_i32_0 = arith.constant 0 : i32
    %c0_i32_1 = arith.constant 0 : i32
    return %c0_i32, %c0_i32_0 : i32, i32
  }
  func.func @transform_9(%arg0: i32) -> (i32, i32) {
    %c0_i32 = arith.constant 0 : i32
    %c0_i32_0 = arith.constant 0 : i32
    %c0_i32_1 = arith.constant 0 : i32
    return %c0_i32, %c0_i32_0 : i32, i32
  }
  func.func @transform_10(%arg0: i32) -> (i32, i32) {
    %c0_i32 = arith.constant 0 : i32
    %c0_i32_0 = arith.constant 0 : i32
    return %arg0, %c0_i32 : i32, i32
  }
}

</mosaic_0001>

<llo_original>
// kernel: tpu_custom_call.1
$region0: #{tpu_custom_call.1}
  #allocation0 [shape = 'u32[]', space=smem, size = 0x4, offset = 0x4, fixed_abs, tag = 'smem constant byte address 0x4 - core index']
  #allocation1 [shape = 'u32[144,128]{1,0:T(1,128)}', space=vmem, size = 0x12000, scoped, tag = 'internal scratch']
  %s0 = inlined_call_operand.vmem [shape: f32[32,20], index: 0, kind: input, shape index: {}]
  %s1 = inlined_call_operand.vmem [shape: bf16[20,128], index: 1, kind: input, shape index: {}]
  %s2 = inlined_call_operand.vmem [shape: f32[1,128], index: 2, kind: input, shape index: {}]
  %s3 = inlined_call_operand.hbm [shape: bf16[128,512], index: 3, kind: input, shape index: {}]
  %s4 = inlined_call_operand.vmem [shape: f32[1,512], index: 4, kind: input, shape index: {}]
  %s5 = inlined_call_operand.hbm [shape: bf16[512,128], index: 5, kind: input, shape index: {}]
  %s6 = inlined_call_operand.vmem [shape: f32[1,128], index: 6, kind: input, shape index: {}]
  %s7 = inlined_call_operand.vmem [shape: f32[8,128], index: 7, kind: input, shape index: {}]
  %s8 = inlined_call_operand.vmem [shape: f32[4,128], index: 8, kind: input, shape index: {}]
  %s9 = inlined_call_operand.hbm [shape: f32[128,128], index: 9, kind: input, shape index: {}]
  %s10 = inlined_call_operand.hbm [shape: bf16[32,128], index: 10, kind: output, shape index: {}]
  %s11 = sld [smem:[#allocation0]]
  $region85: #{tpu_custom_call.1} parent=0
    _
  %s13 = ssub.s32 1, %s11
  %s14 = scalar_select 0, %s13, %s11
  $region1: #{tpu_custom_call.1} parent=0
    #allocation2 [shape = 'u8[131072]{0}', space=vmem, size = 0x20000, scoped, tag = 'input window, operand 3, single buffered']
    #allocation3 [shape = 's32[2]{0}', space=sflag, size = 0x8, scoped, tag = 'scoped memory for tpu_custom_call.1']
    #allocation4 [shape = 's32[2]{0}', space=sflag, size = 0x8, scoped, tag = 'scoped memory for tpu_custom_call.1']
    #allocation5 [shape = 'u8[131072]{0}', space=vmem, size = 0x20000, scoped, tag = 'input window, operand 5, single buffered']
    #allocation6 [shape = 's32[1]{0}', space=sflag, size = 0x4, scoped, tag = 'scoped memory for tpu_custom_call.1']
    #allocation7 [shape = 'u8[65536]{0}', space=vmem, size = 0x10000, scoped, tag = 'input window, operand 9, single buffered']
    #allocation8 [shape = 'u8[8192]{0}', space=vmem, size = 0x2000, scoped, tag = 'output window, operand 0']
    %15 = vsyncpa [#allocation3], 0
    %16 = vsyncpa [#allocation6], 0
    %17 = vsyncpa [#allocation4], 0
    %s18 = scalar_lea.sflag [#allocation4], 1
    %19 = vsyncpa %s18, 0
    loop: start=0, step=1, limit=4
    $region2: #{tpu_custom_call.1} parent=1 // loop_pre_header
      _
    $region3: #{tpu_custom_call.1} parent=1 // loop_header
      %s21 = sphi 0, %s25
      %p22 = scmp.ge.s32.totalorder %s21, 4
      %s31 = sphi 0, %s33
      %s34 = sphi 0, %s31
      %s35 = sphi 0, %s34
      %s51 = sphi 0, %s35
      %s55 = sphi 0, %s55
      %s57 = sphi 0, %s55
      %s58 = sphi 0, %s57
      %s72 = sphi 0, %s58
      %s76 = sphi 0, %s76
      %s78 = sphi 0, %s76
      %s79 = sphi 0, %s78
      %s93 = sphi 0, %s79
      %s97 = sphi 0, %s97
      %s99 = sphi 0, %s97
      %s100 = sphi 0, %s99
      %s114 = sphi 0, %s100
      %s118 = sphi 0, %s118
      %s120 = sphi 0, %s118
      %s121 = sphi 0, %s120
      %s135 = sphi 0, %s121
      %s139 = sphi 0, %s139
      %s141 = sphi 0, %s139
      %s142 = sphi 0, %s141
      %s156 = sphi 0, %s142
      %s160 = sphi 0, %s160
      %s162 = sphi 0, %s160
      %s163 = sphi 0, %s162
      %s177 = sphi 0, %s163
      %s181 = sphi 0, %s181
      %s183 = sphi 0, %s181
      %s184 = sphi 0, %s183
      %s198 = sphi 0, %s184
      %s202 = sphi 0, %s202
      %s204 = sphi 0, %s202
      %s205 = sphi 0, %s204
      %s219 = sphi 0, %s205
      %s223 = sphi 0, %s223
      %s225 = sphi 0, %s223
      %s226 = sphi 0, %s225
      %s240 = sphi 0, %s226
      %s246 = sphi 0, %s248
      %s249 = sphi 0, %s246
      %s250 = sphi 0, %s249
      %s266 = sphi 0, %s250
    $region4: #{tpu_custom_call.1} parent=1 // loop_header_branch
      %24 = sbr.rel (%p22) target = $region8
    $region5: #{tpu_custom_call.1} parent=1 // loop_body
      %s26 = ssub.s32 %s21, 1
      %s27 = ssub.s32 %s21, 2
      %s28 = sadd.s32 %s21, 1
      %s29 = ssub.s32 %s21, %s28
      %p30 = scmp.eq.s32.totalorder %s29, 0
      %s32 = sadd.s32 %s31, 1
      %s33 = scalar_select %p30, %s31, %s32
      %p36 = pneg %p30
      %p37 = scmp.eq.s32.totalorder %s21, 1
      %p38 = por %p36, %p37
      %p39 = scmp.ne.s32.totalorder %s31, %s34
      %p40 = scmp.eq.s32.totalorder %s21, 0
      %p41 = por %p39, %p40
      %p42 = scmp.ne.s32.totalorder %s31, %s34
      %p43 = scmp.eq.s32.totalorder %s26, 1
      %p44 = por %p42, %p43
      %p45 = scmp.ne.s32.totalorder %s34, %s35
      %p46 = scmp.eq.s32.totalorder %s26, 0
      %p47 = por %p45, %p46
      %p48 = scmp.ne.s32.totalorder %s34, %s35
      %p49 = scmp.eq.s32.totalorder %s27, 1
      %p50 = por %p48, %p49
      %p52 = scmp.ne.s32.totalorder %s35, %s51
      %p53 = scmp.eq.s32.totalorder %s27, 0
      %p54 = por %p52, %p53
      %s56 = sadd.s32 %s55, 1
      %p59 = scmp.eq.s32.totalorder %s21, 1
      %p60 = scmp.ne.s32.totalorder %s55, %s57
      %p61 = scmp.eq.s32.totalorder %s21, 0
      %p62 = por %p60, %p61
      %p63 = scmp.ne.s32.totalorder %s55, %s57
      %p64 = scmp.eq.s32.totalorder %s26, 1
      %p65 = por %p63, %p64
      %p66 = scmp.ne.s32.totalorder %s57, %s58
      %p67 = scmp.eq.s32.totalorder %s26, 0
      %p68 = por %p66, %p67
      %p69 = scmp.ne.s32.totalorder %s57, %s58
      %p70 = scmp.eq.s32.totalorder %s27, 1
      %p71 = por %p69, %p70
      %p73 = scmp.ne.s32.totalorder %s58, %s72
      %p74 = scmp.eq.s32.totalorder %s27, 0
      %p75 = por %p73, %p74
      %s77 = sadd.s32 %s76, 1
      %p80 = scmp.eq.s32.totalorder %s21, 1
      %p81 = scmp.ne.s32.totalorder %s76, %s78
      %p82 = scmp.eq.s32.totalorder %s21, 0
      %p83 = por %p81, %p82
      %p84 = scmp.ne.s32.totalorder %s76, %s78
      %p85 = scmp.eq.s32.totalorder %s26, 1
      %p86 = por %p84, %p85
      %p87 = scmp.ne.s32.totalorder %s78, %s79
      %p88 = scmp.eq.s32.totalorder %s26, 0
      %p89 = por %p87, %p88
      %p90 = scmp.ne.s32.totalorder %s78, %s79
      %p91 = scmp.eq.s32.totalorder %s27, 1
      %p92 = por %p90, %p91
      %p94 = scmp.ne.s32.totalorder %s79, %s93
      %p95 = scmp.eq.s32.totalorder %s27, 0
      %p96 = por %p94, %p95
      %s98 = sadd.s32 %s97, 1
      %p101 = scmp.eq.s32.totalorder %s21, 1
      %p102 = scmp.ne.s32.totalorder %s97, %s99
      %p103 = scmp.eq.s32.totalorder %s21, 0
      %p104 = por %p102, %p103
      %p105 = scmp.ne.s32.totalorder %s97, %s99
      %p106 = scmp.eq.s32.totalorder %s26, 1
      %p107 = por %p105, %p106
      %p108 = scmp.ne.s32.totalorder %s99, %s100
      %p109 = scmp.eq.s32.totalorder %s26, 0
      %p110 = por %p108, %p109
      %p111 = scmp.ne.s32.totalorder %s99, %s100
      %p112 = scmp.eq.s32.totalorder %s27, 1
      %p113 = por %p111, %p112
      %p115 = scmp.ne.s32.totalorder %s100, %s114
      %p116 = scmp.eq.s32.totalorder %s27, 0
      %p117 = por %p115, %p116
      %s119 = sadd.s32 %s118, 1
      %p122 = scmp.eq.s32.totalorder %s21, 1
      %p123 = scmp.ne.s32.totalorder %s118, %s120
      %p124 = scmp.eq.s32.totalorder %s21, 0
      %p125 = por %p123, %p124
      %p126 = scmp.ne.s32.totalorder %s118, %s120
      %p127 = scmp.eq.s32.totalorder %s26, 1
      %p128 = por %p126, %p127
      %p129 = scmp.ne.s32.totalorder %s120, %s121
      %p130 = scmp.eq.s32.totalorder %s26, 0
      %p131 = por %p129, %p130
      %p132 = scmp.ne.s32.totalorder %s120, %s121
      %p133 = scmp.eq.s32.totalorder %s27, 1
      %p134 = por %p132, %p133
      %p136 = scmp.ne.s32.totalorder %s121, %s135
      %p137 = scmp.eq.s32.totalorder %s27, 0
      %p138 = por %p136, %p137
      %s140 = sadd.s32 %s139, 1
      %p143 = scmp.eq.s32.totalorder %s21, 1
      %p144 = scmp.ne.s32.totalorder %s139, %s141
      %p145 = scmp.eq.s32.totalorder %s21, 0
      %p146 = por %p144, %p145
      %p147 = scmp.ne.s32.totalorder %s139, %s141
      %p148 = scmp.eq.s32.totalorder %s26, 1
      %p149 = por %p147, %p148
      %p150 = scmp.ne.s32.totalorder %s141, %s142
      %p151 = scmp.eq.s32.totalorder %s26, 0
      %p152 = por %p150, %p151
      %p153 = scmp.ne.s32.totalorder %s141, %s142
      %p154 = scmp.eq.s32.totalorder %s27, 1
      %p155 = por %p153, %p154
      %p157 = scmp.ne.s32.totalorder %s142, %s156
      %p158 = scmp.eq.s32.totalorder %s27, 0
      %p159 = por %p157, %p158
      %s161 = sadd.s32 %s160, 1
      %p164 = scmp.eq.s32.totalorder %s21, 1
      %p165 = scmp.ne.s32.totalorder %s160, %s162
      %p166 = scmp.eq.s32.totalorder %s21, 0
      %p167 = por %p165, %p166
      %p168 = scmp.ne.s32.totalorder %s160, %s162
      %p169 = scmp.eq.s32.totalorder %s26, 1
      %p170 = por %p168, %p169
      %p171 = scmp.ne.s32.totalorder %s162, %s163
      %p172 = scmp.eq.s32.totalorder %s26, 0
      %p173 = por %p171, %p172
      %p174 = scmp.ne.s32.totalorder %s162, %s163
      %p175 = scmp.eq.s32.totalorder %s27, 1
      %p176 = por %p174, %p175
      %p178 = scmp.ne.s32.totalorder %s163, %s177
      %p179 = scmp.eq.s32.totalorder %s27, 0
      %p180 = por %p178, %p179
      %s182 = sadd.s32 %s181, 1
      %p185 = scmp.eq.s32.totalorder %s21, 1
      %p186 = scmp.ne.s32.totalorder %s181, %s183
      %p187 = scmp.eq.s32.totalorder %s21, 0
      %p188 = por %p186, %p187
      %p189 = scmp.ne.s32.totalorder %s181, %s183
      %p190 = scmp.eq.s32.totalorder %s26, 1
      %p191 = por %p189, %p190
      %p192 = scmp.ne.s32.totalorder %s183, %s184
      %p193 = scmp.eq.s32.totalorder %s26, 0
      %p194 = por %p192, %p193
      %p195 = scmp.ne.s32.totalorder %s183, %s184
      %p196 = scmp.eq.s32.totalorder %s27, 1
      %p197 = por %p195, %p196
      %p199 = scmp.ne.s32.totalorder %s184, %s198
      %p200 = scmp.eq.s32.totalorder %s27, 0
      %p201 = por %p199, %p200
      %s203 = sadd.s32 %s202, 1
      %p206 = scmp.eq.s32.totalorder %s21, 1
      %p207 = scmp.ne.s32.totalorder %s202, %s204
      %p208 = scmp.eq.s32.totalorder %s21, 0
      %p209 = por %p207, %p208
      %p210 = scmp.ne.s32.totalorder %s202, %s204
      %p211 = scmp.eq.s32.totalorder %s26, 1
      %p212 = por %p210, %p211
      %p213 = scmp.ne.s32.totalorder %s204, %s205
      %p214 = scmp.eq.s32.totalorder %s26, 0
      %p215 = por %p213, %p214
      %p216 = scmp.ne.s32.totalorder %s204, %s205
      %p217 = scmp.eq.s32.totalorder %s27, 1
      %p218 = por %p216, %p217
      %p220 = scmp.ne.s32.totalorder %s205, %s219
      %p221 = scmp.eq.s32.totalorder %s27, 0
      %p222 = por %p220, %p221
      %s224 = sadd.s32 %s223, 1
      %p227 = scmp.eq.s32.totalorder %s21, 1
      %p228 = scmp.ne.s32.totalorder %s223, %s225
      %p229 = scmp.eq.s32.totalorder %s21, 0
      %p230 = por %p228, %p229
      %p231 = scmp.ne.s32.totalorder %s223, %s225
      %p232 = scmp.eq.s32.totalorder %s26, 1
      %p233 = por %p231, %p232
      %p234 = scmp.ne.s32.totalorder %s225, %s226
      %p235 = scmp.eq.s32.totalorder %s26, 0
      %p236 = por %p234, %p235
      %p237 = scmp.ne.s32.totalorder %s225, %s226
      %p238 = scmp.eq.s32.totalorder %s27, 1
      %p239 = por %p237, %p238
      %p241 = scmp.ne.s32.totalorder %s226, %s240
      %p242 = scmp.eq.s32.totalorder %s27, 0
      %p243 = por %p241, %p242
      %s244 = ssub.s32 %s21, %s28
      %p245 = scmp.eq.s32.totalorder %s244, 0
      %s247 = sadd.s32 %s246, 1
      %s248 = scalar_select %p245, %s246, %s247
      %p251 = pneg %p245
      %p252 = scmp.eq.s32.totalorder %s21, 1
      %p253 = por %p251, %p252
      %p254 = scmp.ne.s32.totalorder %s246, %s249
      %p255 = scmp.eq.s32.totalorder %s21, 0
      %p256 = por %p254, %p255
      %p257 = scmp.ne.s32.totalorder %s246, %s249
      %p258 = scmp.eq.s32.totalorder %s26, 1
      %p259 = por %p257, %p258
      %p260 = scmp.ne.s32.totalorder %s249, %s250
      %p261 = scmp.eq.s32.totalorder %s26, 0
      %p262 = por %p260, %p261
      %p263 = scmp.ne.s32.totalorder %s249, %s250
      %p264 = scmp.eq.s32.totalorder %s27, 1
      %p265 = por %p263, %p264
      %p267 = scmp.ne.s32.totalorder %s250, %s266
      %p268 = scmp.eq.s32.totalorder %s27, 0
      %p269 = por %p267, %p268
      %p270 = scmp.le.s32.totalorder 1, %s21
      %p271 = scmp.lt.s32.totalorder %s21, 3
      %p272 = pnand %p270, %p271
      %p273 = pneg %p272
      // Predicated region
      $region9: #{tpu_custom_call.1} parent=5 // pred_check
        _
      $region10: #{tpu_custom_call.1} parent=5 // pred_check_branch
        %275 = sbr.rel (%p272) target = $region12
      $region11: #{tpu_custom_call.1} parent=5 // pred_region
        %s276 = ssub.s32 %s21, 1
        // Predicated region
        $region13: #{tpu_custom_call.1} parent=11 // pred_check
          %p277 = pneg %p68
        $region14: #{tpu_custom_call.1} parent=11 // pred_check_branch
          %279 = sbr.rel (%p277) target = $region16
        $region15: #{tpu_custom_call.1} parent=11 // pred_region
          _
        $region16: #{tpu_custom_call.1} parent=11 // pred_fallthru
          _
        // Predicated region
        $region17: #{tpu_custom_call.1} parent=11 // pred_check
          %p280 = pneg %p89
        $region18: #{tpu_custom_call.1} parent=11 // pred_check_branch
          %282 = sbr.rel (%p280) target = $region20
        $region19: #{tpu_custom_call.1} parent=11 // pred_region
          _
        $region20: #{tpu_custom_call.1} parent=11 // pred_fallthru
          _
        // Predicated region
        $region21: #{tpu_custom_call.1} parent=11 // pred_check
          %p283 = pneg %p110
        $region22: #{tpu_custom_call.1} parent=11 // pred_check_branch
          %285 = sbr.rel (%p283) target = $region24
        $region23: #{tpu_custom_call.1} parent=11 // pred_region
          %s287 = ssub.s32 4096, 4096
          %288 = vsyncadd [#allocation3], %s287
          %s289 = sshll.u32 [#allocation2], 4
          %s290 = int_to_ptr.vmem [resolvable:$true] %s289
          %295 = dma.hbm_to_vmem [thread:$0]  %s3, 4096, %s290, [#allocation3], 256, 256, 16
        $region24: #{tpu_custom_call.1} parent=11 // pred_fallthru
          _
        // Predicated region
        $region25: #{tpu_custom_call.1} parent=11 // pred_check
          %p296 = pneg %p131
        $region26: #{tpu_custom_call.1} parent=11 // pred_check_branch
          %298 = sbr.rel (%p296) target = $region28
        $region27: #{tpu_custom_call.1} parent=11 // pred_region
          _
        $region28: #{tpu_custom_call.1} parent=11 // pred_fallthru
          _
        // Predicated region
        $region29: #{tpu_custom_call.1} parent=11 // pred_check
          %p299 = pneg %p152
        $region30: #{tpu_custom_call.1} parent=11 // pred_check_branch
          %301 = sbr.rel (%p299) target = $region32
        $region31: #{tpu_custom_call.1} parent=11 // pred_region
          %s303 = ssub.s32 4096, 4096
          %304 = vsyncadd [#allocation6], %s303
          %s305 = sshll.u32 [#allocation5], 4
          %s306 = int_to_ptr.vmem [resolvable:$true] %s305
          %311 = dma.hbm_to_vmem [thread:$0]  %s5, 4096, %s306, [#allocation6], 64, 64, 4
        $region32: #{tpu_custom_call.1} parent=11 // pred_fallthru
          _
        // Predicated region
        $region33: #{tpu_custom_call.1} parent=11 // pred_check
          %p312 = pneg %p173
        $region34: #{tpu_custom_call.1} parent=11 // pred_check_branch
          %314 = sbr.rel (%p312) target = $region36
        $region35: #{tpu_custom_call.1} parent=11 // pred_region
          _
        $region36: #{tpu_custom_call.1} parent=11 // pred_fallthru
          _
        // Predicated region
        $region37: #{tpu_custom_call.1} parent=11 // pred_check
          %p315 = pneg %p194
        $region38: #{tpu_custom_call.1} parent=11 // pred_check_branch
          %317 = sbr.rel (%p315) target = $region40
        $region39: #{tpu_custom_call.1} parent=11 // pred_region
          _
        $region40: #{tpu_custom_call.1} parent=11 // pred_fallthru
          _
        // Predicated region
        $region41: #{tpu_custom_call.1} parent=11 // pred_check
          %p318 = pneg %p215
        $region42: #{tpu_custom_call.1} parent=11 // pred_check_branch
          %320 = sbr.rel (%p318) target = $region44
        $region43: #{tpu_custom_call.1} parent=11 // pred_region
          _
        $region44: #{tpu_custom_call.1} parent=11 // pred_fallthru
          _
        // Predicated region
        $region45: #{tpu_custom_call.1} parent=11 // pred_check
          %p321 = pneg %p236
        $region46: #{tpu_custom_call.1} parent=11 // pred_check_branch
          %323 = sbr.rel (%p321) target = $region48
        $region47: #{tpu_custom_call.1} parent=11 // pred_region
          %s325 = ssub.s32 2048, 2048
          %326 = vsyncadd [#allocation6], %s325
          %s327 = sshll.u32 [#allocation7], 4
          %s328 = int_to_ptr.vmem [resolvable:$true] %s327
          %333 = dma.hbm_to_vmem [thread:$0]  %s9, 2048, %s328, [#allocation6], 128, 128, 8
        $region48: #{tpu_custom_call.1} parent=11 // pred_fallthru
          _
      $region12: #{tpu_custom_call.1} parent=5 // pred_fallthru
        _
      %p334 = scmp.lt.s32.totalorder %s21, 2
      // Predicated region
      $region49: #{tpu_custom_call.1} parent=5 // pred_check
        %p335 = pneg %p334
      $region50: #{tpu_custom_call.1} parent=5 // pred_check_branch
        %337 = sbr.rel (%p335) target = $region52
      $region51: #{tpu_custom_call.1} parent=5 // pred_region
        // Predicated region
        $region53: #{tpu_custom_call.1} parent=51 // pred_check
          %p338 = pneg %p41
        $region54: #{tpu_custom_call.1} parent=51 // pred_check_branch
          %340 = sbr.rel (%p338) target = $region56
        $region55: #{tpu_custom_call.1} parent=51 // pred_region
          %s341 = smul.u32 2, %s21
          %p342 = scmp.lt.s32.totalorder %s341, 3
          %s343 = scalar_select %p342, %s341, 3
          %s344 = smul.addr %s343, 8
          %s345 = scalar_lea.vmem %s0, %s344
          %s346 = smul.u32 2, %s21
        $region56: #{tpu_custom_call.1} parent=51 // pred_fallthru
          _
      $region52: #{tpu_custom_call.1} parent=5 // pred_fallthru
        _
      %p347 = scmp.le.s32.totalorder 1, %s21
      %p348 = scmp.lt.s32.totalorder %s21, 3
      %p349 = pnand %p347, %p348
      %p350 = pneg %p349
      // Predicated region
      $region57: #{tpu_custom_call.1} parent=5 // pred_check
        _
      $region58: #{tpu_custom_call.1} parent=5 // pred_check_branch
        %352 = sbr.rel (%p349) target = $region60
      $region59: #{tpu_custom_call.1} parent=5 // pred_region
        %s353 = ssub.s32 %s21, 1
        // Predicated region
        $region61: #{tpu_custom_call.1} parent=59 // pred_check
          %p354 = pneg %p110
        $region62: #{tpu_custom_call.1} parent=59 // pred_check_branch
          %356 = sbr.rel (%p354) target = $region64
        $region63: #{tpu_custom_call.1} parent=59 // pred_region
          %357 = dma.done [#allocation3], 4096
        $region64: #{tpu_custom_call.1} parent=59 // pred_fallthru
          _
        // Predicated region
        $region65: #{tpu_custom_call.1} parent=59 // pred_check
          %p358 = pneg %p152
        $region66: #{tpu_custom_call.1} parent=59 // pred_check_branch
          %360 = sbr.rel (%p358) target = $region68
        $region67: #{tpu_custom_call.1} parent=59 // pred_region
          %361 = dma.done [#allocation6], 4096
        $region68: #{tpu_custom_call.1} parent=59 // pred_fallthru
          _
        // Predicated region
        $region69: #{tpu_custom_call.1} parent=59 // pred_check
          %p362 = pneg %p236
        $region70: #{tpu_custom_call.1} parent=59 // pred_check_branch
          %364 = sbr.rel (%p362) target = $region72
        $region71: #{tpu_custom_call.1} parent=59 // pred_region
          %365 = dma.done [#allocation6], 2048
        $region72: #{tpu_custom_call.1} parent=59 // pred_fallthru
          _
        %s366 = smul.u32 2, %s26
        %p367 = scmp.lt.s32.totalorder %s366, 3
        %s368 = scalar_select %p367, %s366, 3
        %s369 = smul.addr %s368, 8
        %s370 = scalar_lea.vmem %s0, %s369
        %p371 = pneg %p47
        %p372 = pneg %p44
        %p373 = pneg %p68
        %p374 = pneg %p65
        %p375 = pneg %p89
        %p376 = pneg %p86
        %p377 = pneg %p110
        %p378 = pneg %p107
        %p379 = pneg %p131
        %p380 = pneg %p128
        %p381 = pneg %p152
        %p382 = pneg %p149
        %p383 = pneg %p173
        %p384 = pneg %p170
        %p385 = pneg %p194
        %p386 = pneg %p191
        %p387 = pneg %p215
        %p388 = pneg %p212
        %p389 = pneg %p236
        %p390 = pneg %p233
        %p391 = pneg %p262
        %p392 = pneg %p259
        %s393 = sand.u32 %s249, 1
        %s394 = scalar_lea.sflag [#allocation4], %s393
        %s395 = sand.u32 %s249, 1
        %s396 = smul.addr %s395, 8
        %s397 = scalar_lea.vmem [#allocation8], %s396
        %s398 = smul.u32 2, %s26
        %p399 = scmp.lt.s32.totalorder %s398, 3
        %s400 = scalar_select %p399, %s398, 3
        %s401 = smul.addr %s400, 8
        %s402 = scalar_lea.vmem %s0, %s401
        %s403 = smul.u32 2, %s26
        %s404 = smul.u32 2, %s26
        %v406 = vld [vmem:[%s402] sm:$0xff]
        %v407 = vld [vmem:[%s402 + $0x8] sm:$0xff]
        %v408 = vpack.c.bf16 %v407, %v406
        %v409 = vld [vmem:[%s1] sm:$0xf]
        %v410 = vld [vmem:[%s1 + $0x4] sm:$0xf]
        %v411 = vld [vmem:[%s1 + $0x8] sm:$0x3]
        %v412 = vld [vmem:[%s2] sm:$0x1]
        %v414 = vlaneseq
        %v415 = vshrl.u32 %v414, 7
        %v416 = vsub.s32 0, %v415
        %v417 = vrot.slane %v412, %v416
        %v422 = vunpack.c.l.b16 %v409
        %v423 = vunpack.c.l.b16 %v410
        %v424 = vunpack.c.l.b16 %v411
        %v425 = vpack.c.b16 %v423, %v422
        %v426 = vpack.c.b16 %v424, %v424
        %vm428 = vcmask 162816
        %v430 = vsel %vm428, %v408, 0
        %vm432 = vcmask 1041408
        %v434 = vsel %vm432, %v426, 0
        %436 = vmatprep.subr.bf16.mxu0 0
        %437 = vmatpush1.bf16.msra.mxu0 %v425
        %438 = vmatprep.subr.bf16.mxu0 0
        %439 = vmatpush1.bf16.msra.mxu0 %v434
        %440 = vmatprep.subr.bf16.mxu0 0
        %441 = vmatpush1.bf16.msra.mxu0 0
        %442 = vmatprep.subr.bf16.mxu0 0
        %443 = vmatpush1.bf16.msra.mxu0 0
        %444 = vmatprep.subr.bf16.mxu0 0
        %445 = vmatpush1.bf16.msra.mxu0 0
        %446 = vmatprep.subr.bf16.mxu0 0
        %447 = vmatpush1.bf16.msra.mxu0 0
        %448 = vmatprep.subr.bf16.mxu0 0
        %449 = vmatpush1.bf16.msra.mxu0 0
        %450 = vmatprep.subr.bf16.mxu0 0
        %451 = vmatpush1.bf16.msra.mxu0 0
        %452 = vmatprep.subr.bf16.mxu0 0
        %453 = vmatpush1.bf16.msra.mxu0 0
        %454 = vmatprep.subr.bf16.mxu0 0
        %455 = vmatpush1.bf16.msra.mxu0 0
        %456 = vmatprep.subr.bf16.mxu0 0
        %457 = vmatpush1.bf16.msra.mxu0 0
        %458 = vmatprep.subr.bf16.mxu0 0
        %459 = vmatpush1.bf16.msra.mxu0 0
        %460 = vmatprep.subr.bf16.mxu0 0
        %461 = vmatpush1.bf16.msra.mxu0 0
        %462 = vmatprep.subr.bf16.mxu0 0
        %463 = vmatpush1.bf16.msra.mxu0 0
        %464 = vmatprep.subr.bf16.mxu0 0
        %465 = vmatpush1.bf16.msra.mxu0 0
        %466 = vmatprep.subr.bf16.mxu0 0
        %467 = vmatpush1.bf16.msra.mxu0 0
        %468 = vmatprep.mubr.bf16.mxu0 0
        %469 = vmatmul.mubr.bf16.gmra.mrb[0].mxu0 %v430
        %v470 = vpop.f32.mrb[0].mxu0
        %v471 = vadd.f32 %v417, %v470
        %v472 = vpop.f32.mrb[0].mxu0
        %v473 = vpop.f32.mrb[0].mxu0
        %v474 = vadd.f32 %v417, %v473
        %v475 = vpop.f32.mrb[0].mxu0
        %476 = vdwg.mxu0
        %v477 = vmax.f32 %v471, 0.0
        %v478 = vmax.f32 %v474, 0.0
        %v479 = vpack.c.bf16 %v478, %v477
        %v480 = vld [vmem:[#allocation2] sm:$0xff]
        %v481 = vld [vmem:[#allocation2 + $0x8] sm:$0xff]
        %v482 = vld [vmem:[#allocation2 + $0x10] sm:$0xff]
        %v483 = vld [vmem:[#allocation2 + $0x18] sm:$0xff]
        %v484 = vld [vmem:[#allocation2 + $0x20] sm:$0xff]
        %v485 = vld [vmem:[#allocation2 + $0x28] sm:$0xff]
        %v486 = vld [vmem:[#allocation2 + $0x30] sm:$0xff]
        %v487 = vld [vmem:[#allocation2 + $0x38] sm:$0xff]
        %v488 = vld [vmem:[#allocation2 + $0x40] sm:$0xff]
        %v489 = vld [vmem:[#allocation2 + $0x48] sm:$0xff]
        %v490 = vld [vmem:[#allocation2 + $0x50] sm:$0xff]
        %v491 = vld [vmem:[#allocation2 + $0x58] sm:$0xff]
        %v492 = vld [vmem:[#allocation2 + $0x60] sm:$0xff]
        %v493 = vld [vmem:[#allocation2 + $0x68] sm:$0xff]
        %v494 = vld [vmem:[#allocation2 + $0x70] sm:$0xff]
        %v495 = vld [vmem:[#allocation2 + $0x78] sm:$0xff]
        %v496 = vld [vmem:[#allocation2 + $0x80] sm:$0xff]
        %v497 = vld [vmem:[#allocation2 + $0x88] sm:$0xff]
        %v498 = vld [vmem:[#allocation2 + $0x90] sm:$0xff]
        %v499 = vld [vmem:[#allocation2 + $0x98] sm:$0xff]
        %v500 = vld [vmem:[#allocation2 + $0xa0] sm:$0xff]
        %v501 = vld [vmem:[#allocation2 + $0xa8] sm:$0xff]
        %v502 = vld [vmem:[#allocation2 + $0xb0] sm:$0xff]
        %v503 = vld [vmem:[#allocation2 + $0xb8] sm:$0xff]
        %v504 = vld [vmem:[#allocation2 + $0xc0] sm:$0xff]
        %v505 = vld [vmem:[#allocation2 + $0xc8] sm:$0xff]
        %v506 = vld [vmem:[#allocation2 + $0xd0] sm:$0xff]
        %v507 = vld [vmem:[#allocation2 + $0xd8] sm:$0xff]
        %v508 = vld [vmem:[#allocation2 + $0xe0] sm:$0xff]
        %v509 = vld [vmem:[#allocation2 + $0xe8] sm:$0xff]
        %v510 = vld [vmem:[#allocation2 + $0xf0] sm:$0xff]
        %v511 = vld [vmem:[#allocation2 + $0xf8] sm:$0xff]
        %v512 = vld [vmem:[%s4] sm:$0xf]
        %v514 = vlaneseq
        %v515 = vshrl.u32 %v514, 7
        %v516 = vsub.s32 0, %v515
        %v517 = vrot.slane %v512, %v516
        %v518 = vlaneseq
        %v519 = vshrl.u32 %v518, 7
        %v520 = vsub.s32 1, %v519
        %v521 = vrot.slane %v512, %v520
        %v522 = vlaneseq
        %v523 = vshrl.u32 %v522, 7
        %v524 = vsub.s32 2, %v523
        %v525 = vrot.slane %v512, %v524
        %v526 = vlaneseq
        %v527 = vshrl.u32 %v526, 7
        %v528 = vsub.s32 3, %v527
        %v529 = vrot.slane %v512, %v528
        %v566 = vunpack.c.l.b16 %v480
        %v567 = vunpack.c.h.b16 %v480
        %v568 = vunpack.c.l.b16 %v481
        %v569 = vunpack.c.h.b16 %v481
        %v570 = vunpack.c.l.b16 %v482
        %v571 = vunpack.c.h.b16 %v482
        %v572 = vunpack.c.l.b16 %v483
        %v573 = vunpack.c.h.b16 %v483
        %v574 = vunpack.c.l.b16 %v484
        %v575 = vunpack.c.h.b16 %v484
        %v576 = vunpack.c.l.b16 %v485
        %v577 = vunpack.c.h.b16 %v485
        %v578 = vunpack.c.l.b16 %v486
        %v579 = vunpack.c.h.b16 %v486
        %v580 = vunpack.c.l.b16 %v487
        %v581 = vunpack.c.h.b16 %v487
        %v582 = vunpack.c.l.b16 %v488
        %v583 = vunpack.c.h.b16 %v488
        %v584 = vunpack.c.l.b16 %v489
        %v585 = vunpack.c.h.b16 %v489
        %v586 = vunpack.c.l.b16 %v490
        %v587 = vunpack.c.h.b16 %v490
        %v588 = vunpack.c.l.b16 %v491
        %v589 = vunpack.c.h.b16 %v491
        %v590 = vunpack.c.l.b16 %v492
        %v591 = vunpack.c.h.b16 %v492
        %v592 = vunpack.c.l.b16 %v493
        %v593 = vunpack.c.h.b16 %v493
        %v594 = vunpack.c.l.b16 %v494
        %v595 = vunpack.c.h.b16 %v494
        %v596 = vunpack.c.l.b16 %v495
        %v597 = vunpack.c.h.b16 %v495
        %v598 = vunpack.c.l.b16 %v496
        %v599 = vunpack.c.h.b16 %v496
        %v600 = vunpack.c.l.b16 %v497
        %v601 = vunpack.c.h.b16 %v497
        %v602 = vunpack.c.l.b16 %v498
        %v603 = vunpack.c.h.b16 %v498
        %v604 = vunpack.c.l.b16 %v499
        %v605 = vunpack.c.h.b16 %v499
        %v606 = vunpack.c.l.b16 %v500
        %v607 = vunpack.c.h.b16 %v500
        %v608 = vunpack.c.l.b16 %v501
        %v609 = vunpack.c.h.b16 %v501
        %v610 = vunpack.c.l.b16 %v502
        %v611 = vunpack.c.h.b16 %v502
        %v612 = vunpack.c.l.b16 %v503
        %v613 = vunpack.c.h.b16 %v503
        %v614 = vunpack.c.l.b16 %v504
        %v615 = vunpack.c.h.b16 %v504
        %v616 = vunpack.c.l.b16 %v505
        %v617 = vunpack.c.h.b16 %v505
        %v618 = vunpack.c.l.b16 %v506
        %v619 = vunpack.c.h.b16 %v506
        %v620 = vunpack.c.l.b16 %v507
        %v621 = vunpack.c.h.b16 %v507
        %v622 = vunpack.c.l.b16 %v508
        %v623 = vunpack.c.h.b16 %v508
        %v624 = vunpack.c.l.b16 %v509
        %v625 = vunpack.c.h.b16 %v509
        %v626 = vunpack.c.l.b16 %v510
        %v627 = vunpack.c.h.b16 %v510
        %v628 = vunpack.c.l.b16 %v511
        %v629 = vunpack.c.h.b16 %v511
        %v630 = vpack.c.b16 %v570, %v566
        %v631 = vpack.c.b16 %v571, %v567
        %v632 = vpack.c.b16 %v572, %v568
        %v633 = vpack.c.b16 %v573, %v569
        %v634 = vpack.c.b16 %v578, %v574
        %v635 = vpack.c.b16 %v579, %v575
        %v636 = vpack.c.b16 %v580, %v576
        %v637 = vpack.c.b16 %v581, %v577
        %v638 = vpack.c.b16 %v586, %v582
        %v639 = vpack.c.b16 %v587, %v583
        %v640 = vpack.c.b16 %v588, %v584
        %v641 = vpack.c.b16 %v589, %v585
        %v642 = vpack.c.b16 %v594, %v590
        %v643 = vpack.c.b16 %v595, %v591
        %v644 = vpack.c.b16 %v596, %v592
        %v645 = vpack.c.b16 %v597, %v593
        %v646 = vpack.c.b16 %v602, %v598
        %v647 = vpack.c.b16 %v603, %v599
        %v648 = vpack.c.b16 %v604, %v600
        %v649 = vpack.c.b16 %v605, %v601
        %v650 = vpack.c.b16 %v610, %v606
        %v651 = vpack.c.b16 %v611, %v607
        %v652 = vpack.c.b16 %v612, %v608
        %v653 = vpack.c.b16 %v613, %v609
        %v654 = vpack.c.b16 %v618, %v614
        %v655 = vpack.c.b16 %v619, %v615
        %v656 = vpack.c.b16 %v620, %v616
        %v657 = vpack.c.b16 %v621, %v617
        %v658 = vpack.c.b16 %v626, %v622
        %v659 = vpack.c.b16 %v627, %v623
        %v660 = vpack.c.b16 %v628, %v624
        %v661 = vpack.c.b16 %v629, %v625
        %694 = vmatprep.subr.bf16.mxu0 %v631
        %695 = vmatpush1.bf16.msra.mxu0 %v630
        %696 = vmatprep.subr.bf16.mxu0 %v635
        %697 = vmatpush1.bf16.msra.mxu0 %v634
        %698 = vmatprep.subr.bf16.mxu0 %v639
        %699 = vmatpush1.bf16.msra.mxu0 %v638
        %700 = vmatprep.subr.bf16.mxu0 %v643
        %701 = vmatpush1.bf16.msra.mxu0 %v642
        %702 = vmatprep.subr.bf16.mxu0 %v647
        %703 = vmatpush1.bf16.msra.mxu0 %v646
        %704 = vmatprep.subr.bf16.mxu0 %v651
        %705 = vmatpush1.bf16.msra.mxu0 %v650
        %706 = vmatprep.subr.bf16.mxu0 %v655
        %707 = vmatpush1.bf16.msra.mxu0 %v654
        %708 = vmatprep.subr.bf16.mxu0 %v659
        %709 = vmatpush1.bf16.msra.mxu0 %v658
        %710 = vmatprep.subr.bf16.mxu0 0
        %711 = vmatpush1.bf16.msra.mxu0 0
        %712 = vmatprep.subr.bf16.mxu0 0
        %713 = vmatpush1.bf16.msra.mxu0 0
        %714 = vmatprep.subr.bf16.mxu0 0
        %715 = vmatpush1.bf16.msra.mxu0 0
        %716 = vmatprep.subr.bf16.mxu0 0
        %717 = vmatpush1.bf16.msra.mxu0 0
        %718 = vmatprep.subr.bf16.mxu0 0
        %719 = vmatpush1.bf16.msra.mxu0 0
        %720 = vmatprep.subr.bf16.mxu0 0
        %721 = vmatpush1.bf16.msra.mxu0 0
        %722 = vmatprep.subr.bf16.mxu0 0
        %723 = vmatpush1.bf16.msra.mxu0 0
        %724 = vmatprep.subr.bf16.mxu0 0
        %725 = vmatpush1.bf16.msra.mxu0 0
        %726 = vmatprep.mubr.bf16.mxu0 0
        %727 = vmatmul.mubr.bf16.gmra.mrb[0].mxu0 %v479
        %v728 = vpop.f32.mrb[0].mxu0
        %v729 = vadd.f32 %v517, %v728
        %v730 = vpop.f32.mrb[0].mxu0
        %v731 = vadd.f32 %v521, %v730
        %v732 = vpop.f32.mrb[0].mxu0
        %v733 = vadd.f32 %v517, %v732
        %v734 = vpop.f32.mrb[0].mxu0
        %v735 = vadd.f32 %v521, %v734
        %736 = vdwg.mxu0
        %737 = vmatprep.subr.bf16.mxu0 %v633
        %738 = vmatpush1.bf16.msra.mxu0 %v632
        %739 = vmatprep.subr.bf16.mxu0 %v637
        %740 = vmatpush1.bf16.msra.mxu0 %v636
        %741 = vmatprep.subr.bf16.mxu0 %v641
        %742 = vmatpush1.bf16.msra.mxu0 %v640
        %743 = vmatprep.subr.bf16.mxu0 %v645
        %744 = vmatpush1.bf16.msra.mxu0 %v644
        %745 = vmatprep.subr.bf16.mxu0 %v649
        %746 = vmatpush1.bf16.msra.mxu0 %v648
        %747 = vmatprep.subr.bf16.mxu0 %v653
        %748 = vmatpush1.bf16.msra.mxu0 %v652
        %749 = vmatprep.subr.bf16.mxu0 %v657
        %750 = vmatpush1.bf16.msra.mxu0 %v656
        %751 = vmatprep.subr.bf16.mxu0 %v661
        %752 = vmatpush1.bf16.msra.mxu0 %v660
        %753 = vmatprep.subr.bf16.mxu0 0
        %754 = vmatpush1.bf16.msra.mxu0 0
        %755 = vmatprep.subr.bf16.mxu0 0
        %756 = vmatpush1.bf16.msra.mxu0 0
        %757 = vmatprep.subr.bf16.mxu0 0
        %758 = vmatpush1.bf16.msra.mxu0 0
        %759 = vmatprep.subr.bf16.mxu0 0
        %760 = vmatpush1.bf16.msra.mxu0 0
        %761 = vmatprep.subr.bf16.mxu0 0
        %762 = vmatpush1.bf16.msra.mxu0 0
        %763 = vmatprep.subr.bf16.mxu0 0
        %764 = vmatpush1.bf16.msra.mxu0 0
        %765 = vmatprep.subr.bf16.mxu0 0
        %766 = vmatpush1.bf16.msra.mxu0 0
        %767 = vmatprep.subr.bf16.mxu0 0
        %768 = vmatpush1.bf16.msra.mxu0 0
        %769 = vmatprep.mubr.bf16.mxu0 0
        %770 = vmatmul.mubr.bf16.gmra.mrb[0].mxu0 %v479
        %v771 = vpop.f32.mrb[0].mxu0
        %v772 = vadd.f32 %v525, %v771
        %v773 = vpop.f32.mrb[0].mxu0
        %v774 = vadd.f32 %v529, %v773
        %v775 = vpop.f32.mrb[0].mxu0
        %v776 = vadd.f32 %v525, %v775
        %v777 = vpop.f32.mrb[0].mxu0
        %v778 = vadd.f32 %v529, %v777
        %779 = vdwg.mxu0
        %v780 = vmax.f32 %v729, 0.0
        %v781 = vmax.f32 %v731, 0.0
        %v782 = vmax.f32 %v772, 0.0
        %v783 = vmax.f32 %v774, 0.0
        %v784 = vmax.f32 %v733, 0.0
        %v785 = vmax.f32 %v735, 0.0
        %v786 = vmax.f32 %v776, 0.0
        %v787 = vmax.f32 %v778, 0.0
        %v788 = vpack.c.bf16 %v784, %v780
        %v789 = vpack.c.bf16 %v785, %v781
        %v790 = vpack.c.bf16 %v786, %v782
        %v791 = vpack.c.bf16 %v787, %v783
        %v792 = vld [vmem:[#allocation5] sm:$0xf]
        %v793 = vld [vmem:[#allocation5 + $0x4] sm:$0xf]
        %v794 = vld [vmem:[#allocation5 + $0x8] sm:$0xf]
        %v795 = vld [vmem:[#allocation5 + $0xc] sm:$0xf]
        %v796 = vld [vmem:[#allocation5 + $0x10] sm:$0xf]
        %v797 = vld [vmem:[#allocation5 + $0x14] sm:$0xf]
        %v798 = vld [vmem:[#allocation5 + $0x18] sm:$0xf]
        %v799 = vld [vmem:[#allocation5 + $0x1c] sm:$0xf]
        %v800 = vld [vmem:[#allocation5 + $0x20] sm:$0xf]
        %v801 = vld [vmem:[#allocation5 + $0x24] sm:$0xf]
        %v802 = vld [vmem:[#allocation5 + $0x28] sm:$0xf]
        %v803 = vld [vmem:[#allocation5 + $0x2c] sm:$0xf]
        %v804 = vld [vmem:[#allocation5 + $0x30] sm:$0xf]
        %v805 = vld [vmem:[#allocation5 + $0x34] sm:$0xf]
        %v806 = vld [vmem:[#allocation5 + $0x38] sm:$0xf]
        %v807 = vld [vmem:[#allocation5 + $0x3c] sm:$0xf]
        %v808 = vld [vmem:[#allocation5 + $0x40] sm:$0xf]
        %v809 = vld [vmem:[#allocation5 + $0x44] sm:$0xf]
        %v810 = vld [vmem:[#allocation5 + $0x48] sm:$0xf]
        %v811 = vld [vmem:[#allocation5 + $0x4c] sm:$0xf]
        %v812 = vld [vmem:[#allocation5 + $0x50] sm:$0xf]
        %v813 = vld [vmem:[#allocation5 + $0x54] sm:$0xf]
        %v814 = vld [vmem:[#allocation5 + $0x58] sm:$0xf]
        %v815 = vld [vmem:[#allocation5 + $0x5c] sm:$0xf]
        %v816 = vld [vmem:[#allocation5 + $0x60] sm:$0xf]
        %v817 = vld [vmem:[#allocation5 + $0x64] sm:$0xf]
        %v818 = vld [vmem:[#allocation5 + $0x68] sm:$0xf]
        %v819 = vld [vmem:[#allocation5 + $0x6c] sm:$0xf]
        %v820 = vld [vmem:[#allocation5 + $0x70] sm:$0xf]
        %v821 = vld [vmem:[#allocation5 + $0x74] sm:$0xf]
        %v822 = vld [vmem:[#allocation5 + $0x78] sm:$0xf]
        %v823 = vld [vmem:[#allocation5 + $0x7c] sm:$0xf]
        %v824 = vld [vmem:[#allocation5 + $0x80] sm:$0xf]
        %v825 = vld [vmem:[#allocation5 + $0x84] sm:$0xf]
        %v826 = vld [vmem:[#allocation5 + $0x88] sm:$0xf]
        %v827 = vld [vmem:[#allocation5 + $0x8c] sm:$0xf]
        %v828 = vld [vmem:[#allocation5 + $0x90] sm:$0xf]
        %v829 = vld [vmem:[#allocation5 + $0x94] sm:$0xf]
        %v830 = vld [vmem:[#allocation5 + $0x98] sm:$0xf]
        %v831 = vld [vmem:[#allocation5 + $0x9c] sm:$0xf]
        %v832 = vld [vmem:[#allocation5 + $0xa0] sm:$0xf]
        %v833 = vld [vmem:[#allocation5 + $0xa4] sm:$0xf]
        %v834 = vld [vmem:[#allocation5 + $0xa8] sm:$0xf]
        %v835 = vld [vmem:[#allocation5 + $0xac] sm:$0xf]
        %v836 = vld [vmem:[#allocation5 + $0xb0] sm:$0xf]
        %v837 = vld [vmem:[#allocation5 + $0xb4] sm:$0xf]
        %v838 = vld [vmem:[#allocation5 + $0xb8] sm:$0xf]
        %v839 = vld [vmem:[#allocation5 + $0xbc] sm:$0xf]
        %v840 = vld [vmem:[#allocation5 + $0xc0] sm:$0xf]
        %v841 = vld [vmem:[#allocation5 + $0xc4] sm:$0xf]
        %v842 = vld [vmem:[#allocation5 + $0xc8] sm:$0xf]
        %v843 = vld [vmem:[#allocation5 + $0xcc] sm:$0xf]
        %v844 = vld [vmem:[#allocation5 + $0xd0] sm:$0xf]
        %v845 = vld [vmem:[#allocation5 + $0xd4] sm:$0xf]
        %v846 = vld [vmem:[#allocation5 + $0xd8] sm:$0xf]
        %v847 = vld [vmem:[#allocation5 + $0xdc] sm:$0xf]
        %v848 = vld [vmem:[#allocation5 + $0xe0] sm:$0xf]
        %v849 = vld [vmem:[#allocation5 + $0xe4] sm:$0xf]
        %v850 = vld [vmem:[#allocation5 + $0xe8] sm:$0xf]
        %v851 = vld [vmem:[#allocation5 + $0xec] sm:$0xf]
        %v852 = vld [vmem:[#allocation5 + $0xf0] sm:$0xf]
        %v853 = vld [vmem:[#allocation5 + $0xf4] sm:$0xf]
        %v854 = vld [vmem:[#allocation5 + $0xf8] sm:$0xf]
        %v855 = vld [vmem:[#allocation5 + $0xfc] sm:$0xf]
        %v856 = vld [vmem:[%s6] sm:$0x1]
        %v858 = vlaneseq
        %v859 = vshrl.u32 %v858, 7
        %v860 = vsub.s32 0, %v859
        %v861 = vrot.slane %v856, %v860
        %v927 = vunpack.c.l.b16 %v792
        %v928 = vunpack.c.l.b16 %v793
        %v929 = vunpack.c.l.b16 %v794
        %v930 = vunpack.c.l.b16 %v795
        %v931 = vunpack.c.l.b16 %v796
        %v932 = vunpack.c.l.b16 %v797
        %v933 = vunpack.c.l.b16 %v798
        %v934 = vunpack.c.l.b16 %v799
        %v935 = vunpack.c.l.b16 %v800
        %v936 = vunpack.c.l.b16 %v801
        %v937 = vunpack.c.l.b16 %v802
        %v938 = vunpack.c.l.b16 %v803
        %v939 = vunpack.c.l.b16 %v804
        %v940 = vunpack.c.l.b16 %v805
        %v941 = vunpack.c.l.b16 %v806
        %v942 = vunpack.c.l.b16 %v807
        %v943 = vunpack.c.l.b16 %v808
        %v944 = vunpack.c.l.b16 %v809
        %v945 = vunpack.c.l.b16 %v810
        %v946 = vunpack.c.l.b16 %v811
        %v947 = vunpack.c.l.b16 %v812
        %v948 = vunpack.c.l.b16 %v813
        %v949 = vunpack.c.l.b16 %v814
        %v950 = vunpack.c.l.b16 %v815
        %v951 = vunpack.c.l.b16 %v816
        %v952 = vunpack.c.l.b16 %v817
        %v953 = vunpack.c.l.b16 %v818
        %v954 = vunpack.c.l.b16 %v819
        %v955 = vunpack.c.l.b16 %v820
        %v956 = vunpack.c.l.b16 %v821
        %v957 = vunpack.c.l.b16 %v822
        %v958 = vunpack.c.l.b16 %v823
        %v959 = vunpack.c.l.b16 %v824
        %v960 = vunpack.c.l.b16 %v825
        %v961 = vunpack.c.l.b16 %v826
        %v962 = vunpack.c.l.b16 %v827
        %v963 = vunpack.c.l.b16 %v828
        %v964 = vunpack.c.l.b16 %v829
        %v965 = vunpack.c.l.b16 %v830
        %v966 = vunpack.c.l.b16 %v831
        %v967 = vunpack.c.l.b16 %v832
        %v968 = vunpack.c.l.b16 %v833
        %v969 = vunpack.c.l.b16 %v834
        %v970 = vunpack.c.l.b16 %v835
        %v971 = vunpack.c.l.b16 %v836
        %v972 = vunpack.c.l.b16 %v837
        %v973 = vunpack.c.l.b16 %v838
        %v974 = vunpack.c.l.b16 %v839
        %v975 = vunpack.c.l.b16 %v840
        %v976 = vunpack.c.l.b16 %v841
        %v977 = vunpack.c.l.b16 %v842
        %v978 = vunpack.c.l.b16 %v843
        %v979 = vunpack.c.l.b16 %v844
        %v980 = vunpack.c.l.b16 %v845
        %v981 = vunpack.c.l.b16 %v846
        %v982 = vunpack.c.l.b16 %v847
        %v983 = vunpack.c.l.b16 %v848
        %v984 = vunpack.c.l.b16 %v849
        %v985 = vunpack.c.l.b16 %v850
        %v986 = vunpack.c.l.b16 %v851
        %v987 = vunpack.c.l.b16 %v852
        %v988 = vunpack.c.l.b16 %v853
        %v989 = vunpack.c.l.b16 %v854
        %v990 = vunpack.c.l.b16 %v855
        %v991 = vpack.c.b16 %v928, %v927
        %v992 = vpack.c.b16 %v930, %v929
        %v993 = vpack.c.b16 %v932, %v931
        %v994 = vpack.c.b16 %v934, %v933
        %v995 = vpack.c.b16 %v936, %v935
        %v996 = vpack.c.b16 %v938, %v937
        %v997 = vpack.c.b16 %v940, %v939
        %v998 = vpack.c.b16 %v942, %v941
        %v999 = vpack.c.b16 %v944, %v943
        %v1000 = vpack.c.b16 %v946, %v945
        %v1001 = vpack.c.b16 %v948, %v947
        %v1002 = vpack.c.b16 %v950, %v949
        %v1003 = vpack.c.b16 %v952, %v951
        %v1004 = vpack.c.b16 %v954, %v953
        %v1005 = vpack.c.b16 %v956, %v955
        %v1006 = vpack.c.b16 %v958, %v957
        %v1007 = vpack.c.b16 %v960, %v959
        %v1008 = vpack.c.b16 %v962, %v961
        %v1009 = vpack.c.b16 %v964, %v963
        %v1010 = vpack.c.b16 %v966, %v965
        %v1011 = vpack.c.b16 %v968, %v967
        %v1012 = vpack.c.b16 %v970, %v969
        %v1013 = vpack.c.b16 %v972, %v971
        %v1014 = vpack.c.b16 %v974, %v973
        %v1015 = vpack.c.b16 %v976, %v975
        %v1016 = vpack.c.b16 %v978, %v977
        %v1017 = vpack.c.b16 %v980, %v979
        %v1018 = vpack.c.b16 %v982, %v981
        %v1019 = vpack.c.b16 %v984, %v983
        %v1020 = vpack.c.b16 %v986, %v985
        %v1021 = vpack.c.b16 %v988, %v987
        %v1022 = vpack.c.b16 %v990, %v989
        %1055 = vmatprep.subr.bf16.mxu0 0
        %1056 = vmatpush1.bf16.msra.mxu0 %v991
        %1057 = vmatprep.subr.bf16.mxu0 0
        %1058 = vmatpush1.bf16.msra.mxu0 %v992
        %1059 = vmatprep.subr.bf16.mxu0 0
        %1060 = vmatpush1.bf16.msra.mxu0 %v993
        %1061 = vmatprep.subr.bf16.mxu0 0
        %1062 = vmatpush1.bf16.msra.mxu0 %v994
        %1063 = vmatprep.subr.bf16.mxu0 0
        %1064 = vmatpush1.bf16.msra.mxu0 %v995
        %1065 = vmatprep.subr.bf16.mxu0 0
        %1066 = vmatpush1.bf16.msra.mxu0 %v996
        %1067 = vmatprep.subr.bf16.mxu0 0
        %1068 = vmatpush1.bf16.msra.mxu0 %v997
        %1069 = vmatprep.subr.bf16.mxu0 0
        %1070 = vmatpush1.bf16.msra.mxu0 %v998
        %1071 = vmatprep.subr.bf16.mxu0 0
        %1072 = vmatpush1.bf16.msra.mxu0 %v999
        %1073 = vmatprep.subr.bf16.mxu0 0
        %1074 = vmatpush1.bf16.msra.mxu0 %v1000
        %1075 = vmatprep.subr.bf16.mxu0 0
        %1076 = vmatpush1.bf16.msra.mxu0 %v1001
        %1077 = vmatprep.subr.bf16.mxu0 0
        %1078 = vmatpush1.bf16.msra.mxu0 %v1002
        %1079 = vmatprep.subr.bf16.mxu0 0
        %1080 = vmatpush1.bf16.msra.mxu0 %v1003
        %1081 = vmatprep.subr.bf16.mxu0 0
        %1082 = vmatpush1.bf16.msra.mxu0 %v1004
        %1083 = vmatprep.subr.bf16.mxu0 0
        %1084 = vmatpush1.bf16.msra.mxu0 %v1005
        %1085 = vmatprep.subr.bf16.mxu0 0
        %1086 = vmatpush1.bf16.msra.mxu0 %v1006
        %1087 = vmatprep.mubr.bf16.mxu0 %v789
        %1088 = vmatmul.mubr.bf16.gmra.mrb[0].mxu0 %v788
        %v1089 = vpop.f32.mrb[0].mxu0
        %v1090 = vadd.f32 %v861, %v1089
        %v1091 = vpop.f32.mrb[0].mxu0
        %v1092 = vpop.f32.mrb[0].mxu0
        %v1093 = vadd.f32 %v861, %v1092
        %v1094 = vpop.f32.mrb[0].mxu0
        %1095 = vdwg.mxu0
        %1096 = vmatprep.subr.bf16.mxu0 0
        %1097 = vmatpush1.bf16.msra.mxu0 %v1007
        %1098 = vmatprep.subr.bf16.mxu0 0
        %1099 = vmatpush1.bf16.msra.mxu0 %v1008
        %1100 = vmatprep.subr.bf16.mxu0 0
        %1101 = vmatpush1.bf16.msra.mxu0 %v1009
        %1102 = vmatprep.subr.bf16.mxu0 0
        %1103 = vmatpush1.bf16.msra.mxu0 %v1010
        %1104 = vmatprep.subr.bf16.mxu0 0
        %1105 = vmatpush1.bf16.msra.mxu0 %v1011
        %1106 = vmatprep.subr.bf16.mxu0 0
        %1107 = vmatpush1.bf16.msra.mxu0 %v1012
        %1108 = vmatprep.subr.bf16.mxu0 0
        %1109 = vmatpush1.bf16.msra.mxu0 %v1013
        %1110 = vmatprep.subr.bf16.mxu0 0
        %1111 = vmatpush1.bf16.msra.mxu0 %v1014
        %1112 = vmatprep.subr.bf16.mxu0 0
        %1113 = vmatpush1.bf16.msra.mxu0 %v1015
        %1114 = vmatprep.subr.bf16.mxu0 0
        %1115 = vmatpush1.bf16.msra.mxu0 %v1016
        %1116 = vmatprep.subr.bf16.mxu0 0
        %1117 = vmatpush1.bf16.msra.mxu0 %v1017
        %1118 = vmatprep.subr.bf16.mxu0 0
        %1119 = vmatpush1.bf16.msra.mxu0 %v1018
        %1120 = vmatprep.subr.bf16.mxu0 0
        %1121 = vmatpush1.bf16.msra.mxu0 %v1019
        %1122 = vmatprep.subr.bf16.mxu0 0
        %1123 = vmatpush1.bf16.msra.mxu0 %v1020
        %1124 = vmatprep.subr.bf16.mxu0 0
        %1125 = vmatpush1.bf16.msra.mxu0 %v1021
        %1126 = vmatprep.subr.bf16.mxu0 0
        %1127 = vmatpush1.bf16.msra.mxu0 %v1022
        %1128 = vmatprep.mubr.bf16.mxu0 %v791
        %1129 = vmatmul.mubr.bf16.gmra.mrb[0].mxu0 %v790
        %v1130 = vpop.f32.mrb[0].mxu0
        %v1131 = vadd.f32 %v1090, %v1130
        %v1132 = vpop.f32.mrb[0].mxu0
        %v1133 = vpop.f32.mrb[0].mxu0
        %v1134 = vadd.f32 %v1093, %v1133
        %v1135 = vpop.f32.mrb[0].mxu0
        %1136 = vdwg.mxu0
        %v1137 = vld [vmem:[%s7] sm:$0xff]
        %v1138 = vmax.f32 %v1131, 0.0
        %v1139 = vmax.f32 %v1134, 0.0
        %v1140 = vsub.f32 %v406, %v1138
        %v1141 = vsub.f32 %v407, %v1139
        %v1142 = vlaneseq
        %v1143 = vshrl.u32 %v1142, 7
        %v1144 = vsub.s32 0, %v1143
        %v1145 = vrot.slane %v1137, %v1144
        %v1146 = vmul.f32 %v1131, %v1145
        %v1147 = vmul.f32 %v1134, %v1145
        %v1148 = vlaneseq
        %v1149 = vshrl.u32 %v1148, 7
        %v1150 = vsub.s32 1, %v1149
        %v1151 = vrot.slane %v1137, %v1150
        %v1152 = vmul.f32 %v1131, %v1151
        %v1153 = vmul.f32 %v1134, %v1151
        %v1154 = vmul.f32 %v1152, 1.442695
        %v1155 = vpow.pop %v1154
        %v1156 = vmul.f32 %v1153, 1.442695
        %v1157 = vpow.pop %v1156
        %v1158 = vmul.f32 %v1155, %v1151
        %v1159 = vmul.f32 %v1157, %v1151
        %v1160 = vadd.f32 %v1146, %v1158
        %v1161 = vadd.f32 %v1147, %v1159
        %v1162 = vld [vmem:[%s8] sm:$0xf]
        %vm1163 = vcmask 31744
        %v1165 = vsel %vm1163, %v1140, 0
        %v1168 = vsel %vm1163, %v1141, 0
        %vm1170 = vcmask 1043456
        %v1172 = vsel %vm1170, %v1162, 0
        %1174 = vmatprep.subr.mxu0 0.0
        %1175 = vmatpush1.msra.mxu0 %v1172
        %1176 = vmatprep.subr.mxu0 0.0
        %1177 = vmatpush1.msra.mxu0 0.0
        %1178 = vmatprep.subr.mxu0 0.0
        %1179 = vmatpush1.msra.mxu0 0.0
        %1180 = vmatprep.subr.mxu0 0.0
        %1181 = vmatpush1.msra.mxu0 0.0
        %1182 = vmatprep.subr.mxu0 0.0
        %1183 = vmatpush1.msra.mxu0 0.0
        %1184 = vmatprep.subr.mxu0 0.0
        %1185 = vmatpush1.msra.mxu0 0.0
        %1186 = vmatprep.subr.mxu0 0.0
        %1187 = vmatpush1.msra.mxu0 0.0
        %1188 = vmatprep.subr.mxu0 0.0
        %1189 = vmatpush1.msra.mxu0 0.0
        %1190 = vmatprep.subr.mxu0 0.0
        %1191 = vmatpush1.msra.mxu0 0.0
        %1192 = vmatprep.subr.mxu0 0.0
        %1193 = vmatpush1.msra.mxu0 0.0
        %1194 = vmatprep.subr.mxu0 0.0
        %1195 = vmatpush1.msra.mxu0 0.0
        %1196 = vmatprep.subr.mxu0 0.0
        %1197 = vmatpush1.msra.mxu0 0.0
        %1198 = vmatprep.subr.mxu0 0.0
        %1199 = vmatpush1.msra.mxu0 0.0
        %1200 = vmatprep.subr.mxu0 0.0
        %1201 = vmatpush1.msra.mxu0 0.0
        %1202 = vmatprep.subr.mxu0 0.0
        %1203 = vmatpush1.msra.mxu0 0.0
        %1204 = vmatprep.subr.mxu0 0.0
        %1205 = vmatpush1.msra.mxu0 0.0
        %1206 = vmatprep.subr.mxu0 0.0
        %1207 = vmatpush1.msra.mxu0 0.0
        %1208 = vmatprep.subr.mxu0 0.0
        %1209 = vmatpush1.msra.mxu0 0.0
        %1210 = vmatprep.subr.mxu0 0.0
        %1211 = vmatpush1.msra.mxu0 0.0
        %1212 = vmatprep.subr.mxu0 0.0
        %1213 = vmatpush1.msra.mxu0 0.0
        %1214 = vmatprep.subr.mxu0 0.0
        %1215 = vmatpush1.msra.mxu0 0.0
        %1216 = vmatprep.subr.mxu0 0.0
        %1217 = vmatpush1.msra.mxu0 0.0
        %1218 = vmatprep.subr.mxu0 0.0
        %1219 = vmatpush1.msra.mxu0 0.0
        %1220 = vmatprep.subr.mxu0 0.0
        %1221 = vmatpush1.msra.mxu0 0.0
        %1222 = vmatprep.subr.mxu0 0.0
        %1223 = vmatpush1.msra.mxu0 0.0
        %1224 = vmatprep.subr.mxu0 0.0
        %1225 = vmatpush1.msra.mxu0 0.0
        %1226 = vmatprep.subr.mxu0 0.0
        %1227 = vmatpush1.msra.mxu0 0.0
        %1228 = vmatprep.subr.mxu0 0.0
        %1229 = vmatpush1.msra.mxu0 0.0
        %1230 = vmatprep.subr.mxu0 0.0
        %1231 = vmatpush1.msra.mxu0 0.0
        %1232 = vmatprep.subr.mxu0 0.0
        %1233 = vmatpush1.msra.mxu0 0.0
        %1234 = vmatprep.subr.mxu0 0.0
        %1235 = vmatpush1.msra.mxu0 0.0
        %1236 = vmatprep.subr.mxu0 0.0
        %1237 = vmatpush1.msra.mxu0 0.0
        %1238 = vmatprep.mubr.f32.mxu0 0.0
        %1239 = vmatmul.mubr.f32.gmra.mrb[0].mxu0 %v1165
        %v1240 = vpop.f32.mrb[0].mxu0
        %v1241 = vadd.f32 0.0, %v1240
        %v1242 = vpop.f32.mrb[0].mxu0
        %1243 = vmatprep.mubr.f32.mxu0 0.0
        %1244 = vmatmul.mubr.f32.gmra.mrb[0].mxu0 %v1168
        %v1245 = vpop.f32.mrb[0].mxu0
        %v1246 = vadd.f32 0.0, %v1245
        %v1247 = vpop.f32.mrb[0].mxu0
        %1248 = vdwg.mxu0
        %v1249 = vmul.f32 %v1160, %v1241
        %v1250 = vmul.f32 %v1161, %v1246
        %v1251 = vld [vmem:[#allocation7] sm:$0xff]
        %v1252 = vld [vmem:[#allocation7 + $0x8] sm:$0xff]
        %v1253 = vld [vmem:[#allocation7 + $0x10] sm:$0xff]
        %v1254 = vld [vmem:[#allocation7 + $0x18] sm:$0xff]
        %v1255 = vld [vmem:[#allocation7 + $0x20] sm:$0xff]
        %v1256 = vld [vmem:[#allocation7 + $0x28] sm:$0xff]
        %v1257 = vld [vmem:[#allocation7 + $0x30] sm:$0xff]
        %v1258 = vld [vmem:[#allocation7 + $0x38] sm:$0xff]
        %v1259 = vld [vmem:[#allocation7 + $0x40] sm:$0xff]
        %v1260 = vld [vmem:[#allocation7 + $0x48] sm:$0xff]
        %v1261 = vld [vmem:[#allocation7 + $0x50] sm:$0xff]
        %v1262 = vld [vmem:[#allocation7 + $0x58] sm:$0xff]
        %v1263 = vld [vmem:[#allocation7 + $0x60] sm:$0xff]
        %v1264 = vld [vmem:[#allocation7 + $0x68] sm:$0xff]
        %v1265 = vld [vmem:[#allocation7 + $0x70] sm:$0xff]
        %v1266 = vld [vmem:[#allocation7 + $0x78] sm:$0xff]
        %1267 = vmatprep.subr.mxu0 0.0
        %1268 = vmatpush1.msra.mxu0 %v1251
        %1269 = vmatprep.subr.mxu0 0.0
        %1270 = vmatpush1.msra.mxu0 %v1252
        %1271 = vmatprep.subr.mxu0 0.0
        %1272 = vmatpush1.msra.mxu0 %v1253
        %1273 = vmatprep.subr.mxu0 0.0
        %1274 = vmatpush1.msra.mxu0 %v1254
        %1275 = vmatprep.subr.mxu0 0.0
        %1276 = vmatpush1.msra.mxu0 %v1255
        %1277 = vmatprep.subr.mxu0 0.0
        %1278 = vmatpush1.msra.mxu0 %v1256
        %1279 = vmatprep.subr.mxu0 0.0
        %1280 = vmatpush1.msra.mxu0 %v1257
        %1281 = vmatprep.subr.mxu0 0.0
        %1282 = vmatpush1.msra.mxu0 %v1258
        %1283 = vmatprep.subr.mxu0 0.0
        %1284 = vmatpush1.msra.mxu0 %v1259
        %1285 = vmatprep.subr.mxu0 0.0
        %1286 = vmatpush1.msra.mxu0 %v1260
        %1287 = vmatprep.subr.mxu0 0.0
        %1288 = vmatpush1.msra.mxu0 %v1261
        %1289 = vmatprep.subr.mxu0 0.0
        %1290 = vmatpush1.msra.mxu0 %v1262
        %1291 = vmatprep.subr.mxu0 0.0
        %1292 = vmatpush1.msra.mxu0 %v1263
        %1293 = vmatprep.subr.mxu0 0.0
        %1294 = vmatpush1.msra.mxu0 %v1264
        %1295 = vmatprep.subr.mxu0 0.0
        %1296 = vmatpush1.msra.mxu0 %v1265
        %1297 = vmatprep.subr.mxu0 0.0
        %1298 = vmatpush1.msra.mxu0 %v1266
        %1299 = vmatprep.subr.mxu0 0.0
        %1300 = vmatpush1.msra.mxu0 0.0
        %1301 = vmatprep.subr.mxu0 0.0
        %1302 = vmatpush1.msra.mxu0 0.0
        %1303 = vmatprep.subr.mxu0 0.0
        %1304 = vmatpush1.msra.mxu0 0.0
        %1305 = vmatprep.subr.mxu0 0.0
        %1306 = vmatpush1.msra.mxu0 0.0
        %1307 = vmatprep.subr.mxu0 0.0
        %1308 = vmatpush1.msra.mxu0 0.0
        %1309 = vmatprep.subr.mxu0 0.0
        %1310 = vmatpush1.msra.mxu0 0.0
        %1311 = vmatprep.subr.mxu0 0.0
        %1312 = vmatpush1.msra.mxu0 0.0
        %1313 = vmatprep.subr.mxu0 0.0
        %1314 = vmatpush1.msra.mxu0 0.0
        %1315 = vmatprep.subr.mxu0 0.0
        %1316 = vmatpush1.msra.mxu0 0.0
        %1317 = vmatprep.subr.mxu0 0.0
        %1318 = vmatpush1.msra.mxu0 0.0
        %1319 = vmatprep.subr.mxu0 0.0
        %1320 = vmatpush1.msra.mxu0 0.0
        %1321 = vmatprep.subr.mxu0 0.0
        %1322 = vmatpush1.msra.mxu0 0.0
        %1323 = vmatprep.subr.mxu0 0.0
        %1324 = vmatpush1.msra.mxu0 0.0
        %1325 = vmatprep.subr.mxu0 0.0
        %1326 = vmatpush1.msra.mxu0 0.0
        %1327 = vmatprep.subr.mxu0 0.0
        %1328 = vmatpush1.msra.mxu0 0.0
        %1329 = vmatprep.subr.mxu0 0.0
        %1330 = vmatpush1.msra.mxu0 0.0
        %1331 = vmatprep.mubr.f32.mxu0 0.0
        %1332 = vmatmul.mubr.f32.gmra.mrb[0].mxu0 %v1249
        %v1333 = vpop.f32.mrb[0].mxu0
        %v1334 = vadd.f32 0.0, %v1333
        %v1335 = vpop.f32.mrb[0].mxu0
        %1336 = vmatprep.mubr.f32.mxu0 0.0
        %1337 = vmatmul.mubr.f32.gmra.mrb[0].mxu0 %v1250
        %v1338 = vpop.f32.mrb[0].mxu0
        %v1339 = vadd.f32 0.0, %v1338
        %v1340 = vpop.f32.mrb[0].mxu0
        %1341 = vdwg.mxu0
        %v1342 = vmul.f32 %v1334, %v1334
        %v1343 = vmul.f32 %v1339, %v1339
        %1344 = vadd.xlane.f32.xlu0 %v1342
        %v1345 = vpop.xlane.xlu0 %1344
        %1346 = vadd.xlane.f32.xlu0 %v1343
        %v1347 = vpop.xlane.xlu0 %1346
        %v1348 = vmul.f32 %v1345, -0.5
        %v1349 = vmul.f32 %v1347, -0.5
        %v1350 = vlaneseq
        %v1351 = vshrl.u32 %v1350, 7
        %v1352 = vsub.s32 4, %v1351
        %v1353 = vrot.slane %v1137, %v1352
        %v1354 = vmul.f32 %v1241, %v1353
        %v1355 = vmul.f32 %v1246, %v1353
        %v1356 = vlaneseq
        %v1357 = vshrl.u32 %v1356, 7
        %v1358 = vsub.s32 2, %v1357
        %v1359 = vrot.slane %v1137, %v1358
        %v1360 = vmul.f32 %v1131, %v1359
        %v1361 = vmul.f32 %v1134, %v1359
        %v1362 = vadd.f32 %v1354, %v1360
        %v1363 = vadd.f32 %v1355, %v1361
        %v1364 = vlaneseq
        %v1365 = vshrl.u32 %v1364, 7
        %v1366 = vsub.s32 3, %v1365
        %v1367 = vrot.slane %v1137, %v1366
        %v1368 = vmul.f32 %v1348, %v1367
        %v1369 = vmul.f32 %v1349, %v1367
        %v1370 = vadd.f32 %v1362, %v1368
        %v1371 = vadd.f32 %v1363, %v1369
        %v1372 = vpack.c.bf16 %v1371, %v1370
        %v1374 = vunpack.c.l.b16 %v1372
        %v1375 = vunpack.c.h.b16 %v1372
        %v1376 = vpack.c.b16 %v1374, %v1374
        %v1377 = vpack.c.b16 %v1375, %v1375
        %1380 = vst [vmem:[%s397] sm:$0xf] %v1376
        %1381 = vst [vmem:[%s397 + $0x4] sm:$0xf] %v1377
        %s1382 = sand.u32 %s249, 1
        %s1383 = scalar_lea.sflag [#allocation4], %s1382
        %s1384 = sand.u32 %s249, 1
        %s1385 = smul.addr %s1384, 8
        %s1386 = scalar_lea.vmem [#allocation8], %s1385
        // Predicated region
        $region73: #{tpu_custom_call.1} parent=59 // pred_check
          %p1387 = pneg %p259
        $region74: #{tpu_custom_call.1} parent=59 // pred_check_branch
          %1389 = sbr.rel (%p1387) target = $region76
        $region75: #{tpu_custom_call.1} parent=59 // pred_region
          %s1390 = smul.u32 2, %s26
          %s1392 = ssub.s32 128, 128
          %1393 = vsyncadd %s1383, %s1392
          %s1394 = smul.addr %s1390, 64
          %s1395 = scalar_lea.hbm %s10, %s1394
          %s1396 = sshll.u32 %s1386, 4
          %s1397 = int_to_ptr.vmem [resolvable:$true] %s1396
          %1402 = dma.vmem_to_hbm [thread:$0]  %s1397, 128, %s1395, %s1383, 64, 64, 4
        $region76: #{tpu_custom_call.1} parent=59 // pred_fallthru
          _
      $region60: #{tpu_custom_call.1} parent=5 // pred_fallthru
        _
      %p1403 = scmp.le.s32.totalorder 2, %s21
      // Predicated region
      $region77: #{tpu_custom_call.1} parent=5 // pred_check
        %p1404 = pneg %p1403
      $region78: #{tpu_custom_call.1} parent=5 // pred_check_branch
        %1406 = sbr.rel (%p1404) target = $region80
      $region79: #{tpu_custom_call.1} parent=5 // pred_region
        %s1407 = ssub.s32 %s21, 2
        // Predicated region
        $region81: #{tpu_custom_call.1} parent=79 // pred_check
          %p1408 = pneg %p265
        $region82: #{tpu_custom_call.1} parent=79 // pred_check_branch
          %1410 = sbr.rel (%p1408) target = $region84
        $region83: #{tpu_custom_call.1} parent=79 // pred_region
          %s1411 = sand.u32 %s250, 1
          %s1412 = scalar_lea.sflag [#allocation4], %s1411
          %s1413 = sand.u32 %s250, 1
          %s1414 = smul.addr %s1413, 8
          %s1415 = scalar_lea.vmem [#allocation8], %s1414
          %1416 = dma.done %s1412, 128
        $region84: #{tpu_custom_call.1} parent=79 // pred_fallthru
          _
      $region80: #{tpu_custom_call.1} parent=5 // pred_fallthru
        _
    $region6: #{tpu_custom_call.1} parent=1 // loop_footer
      %s25 = sadd.s32 1, %s21
    $region7: #{tpu_custom_call.1} parent=1 // loop_footer_branch
      %20 = sbr.rel target = $region3
    $region8: #{tpu_custom_call.1} parent=1 // loop_exit
      _
    %1417 = vsyncpa [#allocation3], 1
    %s1418 = scalar_lea.sflag [#allocation3], 1
    %1419 = vsyncpa %s1418, 1
    %1420 = vsyncpa [#allocation6], 1
    %1421 = vsyncpa [#allocation4], 1
    %s1422 = scalar_lea.sflag [#allocation4], 1
    %1423 = vsyncpa %s1422, 1

</llo_original>
